<compile_context>
chip_gen: v5e
topology: v5e:2x2
jax: 0.10.0
libtpu: 0.0.40
codegen_flags: <defaults>
</compile_context>

<pallas_src>
import functools
import math

import jax
import jax.numpy as jnp
from jax.experimental import pallas as pl
from jax.experimental.pallas import tpu as pltpu


def _round_up(x, m):
    return ((x + m - 1) // m) * m


# --------------------------------------------------------------------------
# Fused per-sequence kernel.
#   scalar prefetch : n_steps[e]  (Euler steps before event e), SMEM
#   resident inputs : ODE / fused-p_model+GRU / GRU-input weights (padded)
#   per-block inputs: X_loss, M_loss (mask pre-gated by current_time>0),
#                     X_gru (flattened obs), S (one-hot gather)  — E_BLK events
#   output          : loss_acc [4, Mo, Dp]  elementwise accumulators
#                     (0: (x-p)^2*m, 1: |x-p|*m, 2: |x-p|/(x+1e-8)*m, 3: m)
#   scratch         : h [Np, Hp]  hidden state, VMEM-resident across all events
# --------------------------------------------------------------------------
def _odernn_kernel(nsteps_ref,
                   w1, b1, w2, b2, w3, b3,          # ODEFunc
                   w_cat, b_cat,                    # fused [Wp1 | Wgh_r | Wgh_z | Wgh_n]
                   wp2, bp2,                        # p_model output layer
                   wgi, bgi,                        # GRU input-side gates [r|z|n]
                   xl_ref, ml_ref, xg_ref, sg_ref,
                   loss_ref, h_ref, *, dt, Hp, e_blk):
    i = pl.program_id(0)

    @pl.when(i == 0)
    def _init():
        h_ref[...] = jnp.zeros_like(h_ref)
        loss_ref[...] = jnp.zeros_like(loss_ref)

    dt_f = jnp.float32(dt)

    # Loop-invariant bias reads hoisted out of the Euler loop AND event loop.
    b1v = b1[...]
    b2v = b2[...]
    b3v = b3[...]
    b_catv = b_cat[...]
    bp2v = bp2[...]
    bgiv = bgi[...]

    # ---- Euler odeint body: h <- h + dt * L3(tanh(L2(tanh(L1(h)))))
    # TODO(synk): only the fixed-step 'euler' odeint solver is implemented.
    def euler_step(_, hc):
        z1 = jnp.tanh(jnp.dot(hc, w1[...], preferred_element_type=jnp.float32) + b1v)
        z2 = jnp.tanh(jnp.dot(z1, w2[...], preferred_element_type=jnp.float32) + b2v)
        f = jnp.dot(z2, w3[...], preferred_element_type=jnp.float32) + b3v
        return hc + dt_f * f

    h = h_ref[...]
    acc_shape = loss_ref.shape[1:]
    acc_sq = jnp.zeros(acc_shape, jnp.float32)
    acc_ab = jnp.zeros(acc_shape, jnp.float32)
    acc_mp = jnp.zeros(acc_shape, jnp.float32)
    acc_m = jnp.zeros(acc_shape, jnp.float32)

    for j in range(e_blk):                      # static unroll over the event block
        ev = i * e_blk + j
        x = xl_ref[j]                           # [Mo, Dp]
        m = ml_ref[j]                           # [Mo, Dp]
        S = sg_ref[j]                           # [Mo, Np] one-hot gather

        # GRU input-side gates depend only on the event's input — hoisted above
        # the Euler loop so the load + matmul overlap the ODE chain.
        gi = jnp.dot(xg_ref[j], wgi[...], preferred_element_type=jnp.float32) + bgiv

        # Euler odeint (dynamic trip count from SMEM)
        h = jax.lax.fori_loop(0, nsteps_ref[ev], euler_step, h)

        # Gather observed rows, then ONE fused matmul producing both the
        # p_model hidden (cols [0:Hp)) and the GRU hidden-side gates.
        h_i = jnp.dot(S, h, preferred_element_type=jnp.float32)                   # [Mo, Hp]
        hz = jnp.dot(h_i, w_cat[...], preferred_element_type=jnp.float32) + b_catv  # [Mo, 4*Hp]

        # p_model: Linear -> ReLU -> Dropout(eval identity) -> Linear, on h_i only
        # TODO(synk): nn.Dropout treated as eval-mode identity.
        z = jnp.maximum(hz[:, 0:Hp], 0.0)
        p_obs = jnp.dot(z, wp2[...], preferred_element_type=jnp.float32) + bp2v    # [Mo, Dp]

        # masked loss partial sums (mask pre-gated by the current_time>0 flag)
        d = x - p_obs
        acc_sq = acc_sq + d * d * m
        acc_ab = acc_ab + jnp.abs(d) * m
        acc_mp = acc_mp + jnp.abs(d) / (x + 1e-8) * m
        acc_m = acc_m + m

        # GRUCell update of observed samples: h[i_obs] = GRU(x_flat, h[i_obs])
        r = jax.nn.sigmoid(gi[:, 0:Hp] + hz[:, Hp:2 * Hp])
        zg = jax.nn.sigmoid(gi[:, Hp:2 * Hp] + hz[:, 2 * Hp:3 * Hp])
        n = jnp.tanh(gi[:, 2 * Hp:3 * Hp] + r * hz[:, 3 * Hp:4 * Hp])
        new_h_i = (1.0 - zg) * n + zg * h_i

        # Scatter via contraction of S's Mo axis (no host-built S^T).
        # TODO(synk): assumes batch_idx is unique within an event (PyTorch advanced
        # indexing would take "last write wins" for duplicates).
        h = h + jax.lax.dot_general(
            S, new_h_i - h_i,
            dimension_numbers=(((0,), (0,)), ((), ())),
            preferred_element_type=jnp.float32)

    h_ref[...] = h
    loss_ref[0] += acc_sq
    loss_ref[1] += acc_ab
    loss_ref[2] += acc_mp
    loss_ref[3] += acc_m


# --------------------------------------------------------------------------
# Parameter construction (deterministic, mirrors module __init__ shapes).
# Linear: xavier_uniform weights, bias = 0.01.  GRUCell: U(-1/sqrt(H), 1/sqrt(H)).
# Weights stored pre-transposed ([in, out]) and zero-padded to lane width.
# Wp1 and the GRU hidden-side gate weights are fused into one [Hp, 4*Hp] tile.
# --------------------------------------------------------------------------
def init_params(key, input_size, hidden_size, sub_series):
    H = hidden_size
    Hp = _round_up(H, 128)
    D_out = input_size - 1
    Dp = _round_up(D_out, 128)
    Din = input_size * sub_series
    Din_p = _round_up(Din, 8)

    keys = jax.random.split(key, 20)

    def xavier(k, fin, fout):
        lim = math.sqrt(6.0 / (fin + fout))
        return jax.random.uniform(k, (fin, fout), jnp.float32, -lim, lim)

    def pad_to(w, pr, pc):
        return jnp.zeros((pr, pc), jnp.float32).at[:w.shape[0], :w.shape[1]].set(w)

    def lin_bias(n, pn):
        return jnp.zeros((1, pn), jnp.float32).at[:, :n].set(0.01)

    # ODEFunc: Linear(H,H) -> Tanh -> Linear(H,H) -> Tanh -> Linear(H,H)
    w1 = pad_to(xavier(keys[0], H, H), Hp, Hp)
    w2 = pad_to(xavier(keys[1], H, H), Hp, Hp)
    w3 = pad_to(xavier(keys[2], H, H), Hp, Hp)
    ode = (w1, lin_bias(H, Hp), w2, lin_bias(H, Hp), w3, lin_bias(H, Hp))

    # p_model output layer
    wp2 = pad_to(xavier(keys[4], H, D_out), Hp, Dp)
    bp2 = lin_bias(D_out, Dp)

    # Fused h_i-side matmul: columns [Wp1 | Wgh_r | Wgh_z | Wgh_n], each gate at
    # a lane-aligned offset g*Hp.
    k_ = 1.0 / math.sqrt(H)

    def u(kk, shp):
        return jax.random.uniform(kk, shp, jnp.float32, -k_, k_)

    w_cat = jnp.zeros((Hp, 4 * Hp), jnp.float32)
    b_cat = jnp.zeros((1, 4 * Hp), jnp.float32)
    w_cat = w_cat.at[:H, :H].set(xavier(keys[3], H, H))
    b_cat = b_cat.at[:, :H].set(0.01)

    wgi = jnp.zeros((Din_p, 3 * Hp), jnp.float32)
    bgi = jnp.zeros((1, 3 * Hp), jnp.float32)
    kc = 5
    for g in range(3):
        wgi = wgi.at[:Din, g * Hp:g * Hp + H].set(u(keys[kc + 0], (Din, H)))
        bgi = bgi.at[:, g * Hp:g * Hp + H].set(u(keys[kc + 1], (1, H)))
        w_cat = w_cat.at[:H, (g + 1) * Hp:(g + 1) * Hp + H].set(u(keys[kc + 2], (H, H)))
        b_cat = b_cat.at[:, (g + 1) * Hp:(g + 1) * Hp + H].set(u(keys[kc + 3], (1, H)))
        kc += 4

    return {"H": H, "Hp": Hp, "Dp": Dp, "Din": Din, "Din_p": Din_p,
            "ode": ode,
            "hcat": (w_cat, b_cat, wp2, bp2),
            "gru_in": (wgi, bgi)}


# --------------------------------------------------------------------------
# Host-side per-event data prep: static slicing (event_pt is Python ints),
# padding to (Mo, 128)/(Mo, 8) tiles, one-hot gather matrices, exact
# replication of the Python-float current_time / obs_time loop, plus dummy
# no-op events to pad the event count to a multiple of the event block.
# --------------------------------------------------------------------------
def _build_event_data(obs_times, event_pt, X, M, batch_idx, N, dt, Dp, Din_p, n_ev_pad):
    n_events = len(obs_times)
    input_size = X.shape[1]
    D_loss = input_size - 1
    Din = input_size * X.shape[2]

    counts = [int(event_pt[i + 1]) - int(event_pt[i]) for i in range(n_events)]
    Mo = _round_up(max(max(counts), 1), 8)
    Np = _round_up(N, 8)

    # exact Python-float replication of the reference's step bookkeeping
    n_steps, flags = [], []
    t = 0.0
    for ot in obs_times:
        k = 0
        while t < ot:
            t = t + dt
            k += 1
        n_steps.append(k)
        flags.append(1.0 if t > 0 else 0.0)

    x_loss, m_loss, x_gru, s_g = [], [], [], []
    arange_n = jnp.arange(N, dtype=jnp.int32)
    for i in range(n_events):
        s, e = int(event_pt[i]), int(event_pt[i + 1])
        n_obs = e - s
        xo = X[s:e, 1:, 0].astype(jnp.float32)
        mo = (M[s:e, 1:] * flags[i]).astype(jnp.float32)   # gate "current_time > 0"
        xg = X[s:e].reshape(n_obs, Din).astype(jnp.float32)
        S = (batch_idx[s:e].astype(jnp.int32)[:, None] == arange_n[None, :]).astype(jnp.float32)

        x_loss.append(jnp.pad(xo, ((0, Mo - n_obs), (0, Dp - D_loss))))
        m_loss.append(jnp.pad(mo, ((0, Mo - n_obs), (0, Dp - D_loss))))
        x_gru.append(jnp.pad(xg, ((0, Mo - n_obs), (0, Din_p - Din))))
        s_g.append(jnp.pad(S, ((0, Mo - n_obs), (0, Np - N))))

    # dummy padding events: zero steps, zero mask, zero selector -> exact no-ops
    for _ in range(n_ev_pad - n_events):
        n_steps.append(0)
        x_loss.append(jnp.zeros((Mo, Dp), jnp.float32))
        m_loss.append(jnp.zeros((Mo, Dp), jnp.float32))
        x_gru.append(jnp.zeros((Mo, Din_p), jnp.float32))
        s_g.append(jnp.zeros((Mo, Np), jnp.float32))

    return (jnp.asarray(n_steps, jnp.int32),
            jnp.stack(x_loss), jnp.stack(m_loss), jnp.stack(x_gru),
            jnp.stack(s_g), Mo, Np)


# --------------------------------------------------------------------------
# ODERNN.forward (return_path=False branch) — single fused pallas_call with
# event blocking (E_BLK events per grid step).
# --------------------------------------------------------------------------
def odernn_forward(params, obs_times, event_pt, sample_idx, X, M, batch_idx, dt):
    N = int(sample_idx.shape[0])
    Hp, Dp, Din_p = params["Hp"], params["Dp"], params["Din_p"]
    n_events = len(obs_times)

    e_blk = min(8, n_events)
    n_blocks = -(-n_events // e_blk)
    n_ev_pad = n_blocks * e_blk

    (n_steps, x_loss, m_loss, x_gru, s_g, Mo, Np) = _build_event_data(
        obs_times, event_pt, X, M, batch_idx, N, dt, Dp, Din_p, n_ev_pad)

    weights = params["ode"] + params["hcat"] + params["gru_in"]

    def w_spec(w):
        # full-array block, constant index -> DMA'd once, VMEM-resident
        return pl.BlockSpec(w.shape, lambda i, *_: (0,) * w.ndim)

    in_specs = [w_spec(w) for w in weights] + [
        pl.BlockSpec((e_blk, Mo, Dp), lambda i, *_: (i, 0, 0)),      # X_loss
        pl.BlockSpec((e_blk, Mo, Dp), lambda i, *_: (i, 0, 0)),      # M_loss
        pl.BlockSpec((e_blk, Mo, Din_p), lambda i, *_: (i, 0, 0)),   # X_gru
        pl.BlockSpec((e_blk, Mo, Np), lambda i, *_: (i, 0, 0)),      # S (gather)
    ]

    kernel = functools.partial(_odernn_kernel, dt=float(dt), Hp=Hp, e_blk=e_blk)

    loss_acc = pl.pallas_call(
        kernel,
        out_shape=jax.ShapeDtypeStruct((4, Mo, Dp), jnp.float32),
        grid_spec=pltpu.PrefetchScalarGridSpec(
            num_scalar_prefetch=1,
            grid=(n_blocks,),
            in_specs=in_specs,
            out_specs=pl.BlockSpec((4, Mo, Dp), lambda i, *_: (0, 0, 0)),
            scratch_shapes=[pltpu.VMEM((Np, Hp), jnp.float32)],   # hidden state h
        ),
        compiler_params=pltpu.CompilerParams(
            dimension_semantics=("arbitrary",),   # sequential recurrence over event blocks
        ),
    )(n_steps, *weights, x_loss, m_loss, x_gru, s_g)

    sums = jnp.sum(loss_acc, axis=(1, 2))        # [mse, mae, mape, total_M]
    total_M = sums[3]                             # no zero-guard, as in the reference
    return sums[0] / total_M, sums[1] / total_M, sums[2] / total_M


if __name__ == "__main__":
    key = jax.random.PRNGKey(0)
    input_size, sub_series, hidden_size = 4, 2, 32
    n_samples = 4
    dt = 0.5
    obs_times = [0.5, 1.0, 1.5]
    event_pt = [0, 2, 4, 6]
    n_events_total = event_pt[-1]

    kx, km, kp = jax.random.split(key, 3)
    X = jax.random.normal(kx, (n_events_total, input_size, sub_series), jnp.float32)
    M = (jax.random.uniform(km, (n_events_total, input_size)) > 0.3).astype(jnp.float32)
    batch_idx = jnp.array([0, 1, 1, 2, 0, 3], dtype=jnp.int32)
    sample_idx = jnp.arange(n_samples, dtype=jnp.int32)

    params = init_params(kp, input_size, hidden_size, sub_series)

    mse, mae, mape = odernn_forward(
        params, obs_times, event_pt, sample_idx, X, M, batch_idx, dt
    )
    jax.block_until_ready((mse, mae, mape))
    print("KERNEL_OK")
</pallas_src>

<mosaic_0001>
module attributes {stable_mosaic.version = 11 : i64} {
  func.func @_odernn_kernel(%arg0: i32, %arg1: memref<3xi32, #tpu.memory_space<smem>>, %arg2: memref<128x128xf32, #tpu.memory_space<vmem>>, %arg3: memref<1x128xf32, #tpu.memory_space<vmem>>, %arg4: memref<128x128xf32, #tpu.memory_space<vmem>>, %arg5: memref<1x128xf32, #tpu.memory_space<vmem>>, %arg6: memref<128x128xf32, #tpu.memory_space<vmem>>, %arg7: memref<1x128xf32, #tpu.memory_space<vmem>>, %arg8: memref<128x512xf32, #tpu.memory_space<vmem>>, %arg9: memref<1x512xf32, #tpu.memory_space<vmem>>, %arg10: memref<128x128xf32, #tpu.memory_space<vmem>>, %arg11: memref<1x128xf32, #tpu.memory_space<vmem>>, %arg12: memref<8x384xf32, #tpu.memory_space<vmem>>, %arg13: memref<1x384xf32, #tpu.memory_space<vmem>>, %arg14: memref<3x8x128xf32, #tpu.memory_space<vmem>>, %arg15: memref<3x8x128xf32, #tpu.memory_space<vmem>>, %arg16: memref<3x8x8xf32, #tpu.memory_space<vmem>>, %arg17: memref<3x8x8xf32, #tpu.memory_space<vmem>>, %arg18: memref<4x8x128xf32, #tpu.memory_space<vmem>>, %arg19: memref<8x128xf32, #tpu.memory_space<vmem>>) attributes {dimension_semantics = [#tpu.dimension_semantics<arbitrary>], iteration_bounds = array<i64: 1>, scalar_prefetch = 1 : i64, scratch_operands = 1 : i64, tpu.core_type = #tpu.core_type<tc>, window_params = [{pipeline_mode = #tpu.pipeline_mode<synchronous>, transform_indices = @transform_0, window_bounds = array<i64: 128, 128>}, {pipeline_mode = #tpu.pipeline_mode<synchronous>, transform_indices = @transform_1, window_bounds = array<i64: 1, 128>}, {pipeline_mode = #tpu.pipeline_mode<synchronous>, transform_indices = @transform_2, window_bounds = array<i64: 128, 128>}, {pipeline_mode = #tpu.pipeline_mode<synchronous>, transform_indices = @transform_3, window_bounds = array<i64: 1, 128>}, {pipeline_mode = #tpu.pipeline_mode<synchronous>, transform_indices = @transform_4, window_bounds = array<i64: 128, 128>}, {pipeline_mode = #tpu.pipeline_mode<synchronous>, transform_indices = @transform_5, window_bounds = array<i64: 1, 128>}, {pipeline_mode = #tpu.pipeline_mode<synchronous>, transform_indices = @transform_6, window_bounds = array<i64: 128, 512>}, {pipeline_mode = #tpu.pipeline_mode<synchronous>, transform_indices = @transform_7, window_bounds = array<i64: 1, 512>}, {pipeline_mode = #tpu.pipeline_mode<synchronous>, transform_indices = @transform_8, window_bounds = array<i64: 128, 128>}, {pipeline_mode = #tpu.pipeline_mode<synchronous>, transform_indices = @transform_9, window_bounds = array<i64: 1, 128>}, {pipeline_mode = #tpu.pipeline_mode<synchronous>, transform_indices = @transform_10, window_bounds = array<i64: 8, 384>}, {pipeline_mode = #tpu.pipeline_mode<synchronous>, transform_indices = @transform_11, window_bounds = array<i64: 1, 384>}, {transform_indices = @transform_12, window_bounds = array<i64: 3, 8, 128>}, {transform_indices = @transform_13, window_bounds = array<i64: 3, 8, 128>}, {transform_indices = @transform_14, window_bounds = array<i64: 3, 8, 8>}, {transform_indices = @transform_15, window_bounds = array<i64: 3, 8, 8>}, {pipeline_mode = #tpu.pipeline_mode<synchronous>, transform_indices = @transform_16, window_bounds = array<i64: 4, 8, 128>}]} {
    %c0_i32 = arith.constant 0 : i32
    %0 = arith.cmpi eq, %arg0, %c0_i32 : i32
    %1 = arith.extui %0 : i1 to i32
    %c0_i32_0 = arith.constant 0 : i32
    %2 = arith.cmpi ne, %1, %c0_i32_0 : i32
    scf.if %2 {
      %cst_136 = arith.constant 0.000000e+00 : f32
      %261 = vector.broadcast %cst_136 : f32 to vector<8x128xf32>
      %c0_137 = arith.constant 0 : index
      %c0_138 = arith.constant 0 : index
      %262 = vector.load %arg19[%c0_137, %c0_138] : memref<8x128xf32, #tpu.memory_space<vmem>>, vector<8x128xf32>
      tpu.vector_store %arg19[%c0_137, %c0_138], %261 {strides = array<i32>} : memref<8x128xf32, #tpu.memory_space<vmem>>, vector<8x128xf32>,
      %cst_139 = arith.constant 0.000000e+00 : f32
      %263 = vector.broadcast %cst_139 : f32 to vector<4x8x128xf32>
      %c0_140 = arith.constant 0 : index
      %c0_141 = arith.constant 0 : index
      %c0_142 = arith.constant 0 : index
      %264 = vector.load %arg18[%c0_140, %c0_141, %c0_142] : memref<4x8x128xf32, #tpu.memory_space<vmem>>, vector<4x8x128xf32>
      tpu.vector_store %arg18[%c0_140, %c0_141, %c0_142], %263 {strides = array<i32>} : memref<4x8x128xf32, #tpu.memory_space<vmem>>, vector<4x8x128xf32>,
    } else {
    }
    %c0 = arith.constant 0 : index
    %c0_1 = arith.constant 0 : index
    %3 = vector.load %arg3[%c0, %c0_1] : memref<1x128xf32, #tpu.memory_space<vmem>>, vector<1x128xf32>
    %c0_2 = arith.constant 0 : index
    %c0_3 = arith.constant 0 : index
    %4 = vector.load %arg5[%c0_2, %c0_3] : memref<1x128xf32, #tpu.memory_space<vmem>>, vector<1x128xf32>
    %c0_4 = arith.constant 0 : index
    %c0_5 = arith.constant 0 : index
    %5 = vector.load %arg7[%c0_4, %c0_5] : memref<1x128xf32, #tpu.memory_space<vmem>>, vector<1x128xf32>
    %c0_6 = arith.constant 0 : index
    %c0_7 = arith.constant 0 : index
    %6 = vector.load %arg9[%c0_6, %c0_7] : memref<1x512xf32, #tpu.memory_space<vmem>>, vector<1x512xf32>
    %c0_8 = arith.constant 0 : index
    %c0_9 = arith.constant 0 : index
    %7 = vector.load %arg11[%c0_8, %c0_9] : memref<1x128xf32, #tpu.memory_space<vmem>>, vector<1x128xf32>
    %c0_10 = arith.constant 0 : index
    %c0_11 = arith.constant 0 : index
    %8 = vector.load %arg13[%c0_10, %c0_11] : memref<1x384xf32, #tpu.memory_space<vmem>>, vector<1x384xf32>
    %c0_12 = arith.constant 0 : index
    %c0_13 = arith.constant 0 : index
    %9 = vector.load %arg19[%c0_12, %c0_13] : memref<8x128xf32, #tpu.memory_space<vmem>>, vector<8x128xf32>
    %cst = arith.constant 0.000000e+00 : f32
    %10 = vector.broadcast %cst : f32 to vector<8x128xf32>
    %cst_14 = arith.constant 0.000000e+00 : f32
    %11 = vector.broadcast %cst_14 : f32 to vector<8x128xf32>
    %cst_15 = arith.constant 0.000000e+00 : f32
    %12 = vector.broadcast %cst_15 : f32 to vector<8x128xf32>
    %cst_16 = arith.constant 0.000000e+00 : f32
    %13 = vector.broadcast %cst_16 : f32 to vector<8x128xf32>
    %c3_i32 = arith.constant 3 : i32
    %14 = arith.muli %arg0, %c3_i32 : i32
    %c0_i32_17 = arith.constant 0 : i32
    %15 = arith.addi %14, %c0_i32_17 : i32
    %c0_18 = arith.constant 0 : index
    %c0_19 = arith.constant 0 : index
    %c0_20 = arith.constant 0 : index
    %16 = vector.load %arg14[%c0_18, %c0_19, %c0_20] : memref<3x8x128xf32, #tpu.memory_space<vmem>>, vector<1x8x128xf32>
    %17 = vector.shape_cast %16 : vector<1x8x128xf32> to vector<8x128xf32>
    %c0_21 = arith.constant 0 : index
    %c0_22 = arith.constant 0 : index
    %c0_23 = arith.constant 0 : index
    %18 = vector.load %arg15[%c0_21, %c0_22, %c0_23] : memref<3x8x128xf32, #tpu.memory_space<vmem>>, vector<1x8x128xf32>
    %19 = vector.shape_cast %18 : vector<1x8x128xf32> to vector<8x128xf32>
    %c0_24 = arith.constant 0 : index
    %c0_25 = arith.constant 0 : index
    %c0_26 = arith.constant 0 : index
    %20 = vector.load %arg17[%c0_24, %c0_25, %c0_26] : memref<3x8x8xf32, #tpu.memory_space<vmem>>, vector<1x8x8xf32>
    %21 = vector.shape_cast %20 : vector<1x8x8xf32> to vector<8x8xf32>
    %c0_27 = arith.constant 0 : index
    %c0_28 = arith.constant 0 : index
    %c0_29 = arith.constant 0 : index
    %22 = vector.load %arg16[%c0_27, %c0_28, %c0_29] : memref<3x8x8xf32, #tpu.memory_space<vmem>>, vector<1x8x8xf32>
    %23 = vector.shape_cast %22 : vector<1x8x8xf32> to vector<8x8xf32>
    %c0_30 = arith.constant 0 : index
    %c0_31 = arith.constant 0 : index
    %24 = vector.load %arg12[%c0_30, %c0_31] : memref<8x384xf32, #tpu.memory_space<vmem>>, vector<8x384xf32>
    %cst_32 = arith.constant dense<0.000000e+00> : vector<8x384xf32>
    %25 = tpu.matmul %23, %24, %cst_32 {dimension_numbers = #tpu.dot_dimension_numbers<[1], [0], [0], [1], [0, 0, 1, 1], [], []>} : vector<8x8xf32>, vector<8x384xf32>, vector<8x384xf32> -> vector<8x384xf32>
    %26 = vector.broadcast %8 : vector<1x384xf32> to vector<8x384xf32>
    %27 = arith.addf %25, %26 : vector<8x384xf32>
    %28 = arith.index_cast %15 : i32 to index
    %29 = memref.load %arg1[%28] : memref<3xi32, #tpu.memory_space<smem>>
    %cst_33 = arith.constant 5.000000e-01 : f32
    %c0_i32_34 = arith.constant 0 : i32
    %30 = arith.subi %29, %c0_i32_34 : i32
    %31 = arith.addi %c0_i32_34, %30 : i32
    %c1_i32 = arith.constant 1 : i32
    %32 = scf.for %arg20 = %c0_i32_34 to %31 step %c1_i32 iter_args(%arg21 = %9) -> (vector<8x128xf32>)  : i32 {
      %c0_136 = arith.constant 0 : index
      %c0_137 = arith.constant 0 : index
      %261 = vector.load %arg2[%c0_136, %c0_137] : memref<128x128xf32, #tpu.memory_space<vmem>>, vector<128x128xf32>
      %cst_138 = arith.constant dense<0.000000e+00> : vector<8x128xf32>
      %262 = tpu.matmul %arg21, %261, %cst_138 {dimension_numbers = #tpu.dot_dimension_numbers<[1], [0], [0], [1], [0, 0, 1, 1], [], []>} : vector<8x128xf32>, vector<128x128xf32>, vector<8x128xf32> -> vector<8x128xf32>
      %263 = vector.broadcast %3 : vector<1x128xf32> to vector<8x128xf32>
      %264 = arith.addf %262, %263 : vector<8x128xf32>
      %265 = math.tanh %264 : vector<8x128xf32>
      %c0_139 = arith.constant 0 : index
      %c0_140 = arith.constant 0 : index
      %266 = vector.load %arg4[%c0_139, %c0_140] : memref<128x128xf32, #tpu.memory_space<vmem>>, vector<128x128xf32>
      %cst_141 = arith.constant dense<0.000000e+00> : vector<8x128xf32>
      %267 = tpu.matmul %265, %266, %cst_141 {dimension_numbers = #tpu.dot_dimension_numbers<[1], [0], [0], [1], [0, 0, 1, 1], [], []>} : vector<8x128xf32>, vector<128x128xf32>, vector<8x128xf32> -> vector<8x128xf32>
      %268 = vector.broadcast %4 : vector<1x128xf32> to vector<8x128xf32>
      %269 = arith.addf %267, %268 : vector<8x128xf32>
      %270 = math.tanh %269 : vector<8x128xf32>
      %c0_142 = arith.constant 0 : index
      %c0_143 = arith.constant 0 : index
      %271 = vector.load %arg6[%c0_142, %c0_143] : memref<128x128xf32, #tpu.memory_space<vmem>>, vector<128x128xf32>
      %cst_144 = arith.constant dense<0.000000e+00> : vector<8x128xf32>
      %272 = tpu.matmul %270, %271, %cst_144 {dimension_numbers = #tpu.dot_dimension_numbers<[1], [0], [0], [1], [0, 0, 1, 1], [], []>} : vector<8x128xf32>, vector<128x128xf32>, vector<8x128xf32> -> vector<8x128xf32>
      %273 = vector.broadcast %5 : vector<1x128xf32> to vector<8x128xf32>
      %274 = arith.addf %272, %273 : vector<8x128xf32>
      %275 = vector.broadcast %cst_33 : f32 to vector<8x128xf32>
      %276 = arith.mulf %275, %274 : vector<8x128xf32>
      %277 = arith.addf %arg21, %276 : vector<8x128xf32>
      scf.yield %277 : vector<8x128xf32>
    }
    %cst_35 = arith.constant dense<0.000000e+00> : vector<8x128xf32>
    %33 = tpu.matmul %21, %32, %cst_35 {dimension_numbers = #tpu.dot_dimension_numbers<[1], [0], [0], [1], [0, 0, 1, 1], [], []>} : vector<8x8xf32>, vector<8x128xf32>, vector<8x128xf32> -> vector<8x128xf32>
    %c0_36 = arith.constant 0 : index
    %c0_37 = arith.constant 0 : index
    %34 = vector.load %arg8[%c0_36, %c0_37] : memref<128x512xf32, #tpu.memory_space<vmem>>, vector<128x512xf32>
    %cst_38 = arith.constant dense<0.000000e+00> : vector<8x512xf32>
    %35 = tpu.matmul %33, %34, %cst_38 {dimension_numbers = #tpu.dot_dimension_numbers<[1], [0], [0], [1], [0, 0, 1, 1], [], []>} : vector<8x128xf32>, vector<128x512xf32>, vector<8x512xf32> -> vector<8x512xf32>
    %36 = vector.broadcast %6 : vector<1x512xf32> to vector<8x512xf32>
    %37 = arith.addf %35, %36 : vector<8x512xf32>
    %38 = vector.extract_strided_slice %37 {offsets = [0, 0], sizes = [8, 128], strides = [1, 1]} : vector<8x512xf32> to vector<8x128xf32>
    %cst_39 = arith.constant 0.000000e+00 : f32
    %39 = vector.broadcast %cst_39 : f32 to vector<8x128xf32>
    %40 = arith.maximumf %38, %39 : vector<8x128xf32>
    %c0_40 = arith.constant 0 : index
    %c0_41 = arith.constant 0 : index
    %41 = vector.load %arg10[%c0_40, %c0_41] : memref<128x128xf32, #tpu.memory_space<vmem>>, vector<128x128xf32>
    %cst_42 = arith.constant dense<0.000000e+00> : vector<8x128xf32>
    %42 = tpu.matmul %40, %41, %cst_42 {dimension_numbers = #tpu.dot_dimension_numbers<[1], [0], [0], [1], [0, 0, 1, 1], [], []>} : vector<8x128xf32>, vector<128x128xf32>, vector<8x128xf32> -> vector<8x128xf32>
    %43 = vector.broadcast %7 : vector<1x128xf32> to vector<8x128xf32>
    %44 = arith.addf %42, %43 : vector<8x128xf32>
    %45 = arith.subf %17, %44 : vector<8x128xf32>
    %46 = arith.mulf %45, %45 : vector<8x128xf32>
    %47 = arith.mulf %46, %19 : vector<8x128xf32>
    %48 = arith.addf %10, %47 : vector<8x128xf32>
    %49 = math.absf %45 : vector<8x128xf32>
    %50 = arith.mulf %49, %19 : vector<8x128xf32>
    %51 = arith.addf %11, %50 : vector<8x128xf32>
    %52 = math.absf %45 : vector<8x128xf32>
    %cst_43 = arith.constant 9.99999993E-9 : f32
    %53 = vector.broadcast %cst_43 : f32 to vector<8x128xf32>
    %54 = arith.addf %17, %53 : vector<8x128xf32>
    %55 = arith.divf %52, %54 : vector<8x128xf32>
    %56 = arith.mulf %55, %19 : vector<8x128xf32>
    %57 = arith.addf %12, %56 : vector<8x128xf32>
    %58 = arith.addf %13, %19 : vector<8x128xf32>
    %59 = vector.extract_strided_slice %27 {offsets = [0, 0], sizes = [8, 128], strides = [1, 1]} : vector<8x384xf32> to vector<8x128xf32>
    %60 = vector.extract_strided_slice %37 {offsets = [0, 128], sizes = [8, 128], strides = [1, 1]} : vector<8x512xf32> to vector<8x128xf32>
    %61 = arith.addf %59, %60 : vector<8x128xf32>
    %62 = arith.negf %61 : vector<8x128xf32>
    %63 = math.exp %62 : vector<8x128xf32>
    %cst_44 = arith.constant 1.000000e+00 : f32
    %64 = vector.broadcast %cst_44 : f32 to vector<8x128xf32>
    %65 = arith.addf %64, %63 : vector<8x128xf32>
    %66 = arith.divf %64, %65 : vector<8x128xf32>
    %67 = vector.extract_strided_slice %27 {offsets = [0, 128], sizes = [8, 128], strides = [1, 1]} : vector<8x384xf32> to vector<8x128xf32>
    %68 = vector.extract_strided_slice %37 {offsets = [0, 256], sizes = [8, 128], strides = [1, 1]} : vector<8x512xf32> to vector<8x128xf32>
    %69 = arith.addf %67, %68 : vector<8x128xf32>
    %70 = arith.negf %69 : vector<8x128xf32>
    %71 = math.exp %70 : vector<8x128xf32>
    %cst_45 = arith.constant 1.000000e+00 : f32
    %72 = vector.broadcast %cst_45 : f32 to vector<8x128xf32>
    %73 = arith.addf %72, %71 : vector<8x128xf32>
    %74 = arith.divf %72, %73 : vector<8x128xf32>
    %75 = vector.extract_strided_slice %27 {offsets = [0, 256], sizes = [8, 128], strides = [1, 1]} : vector<8x384xf32> to vector<8x128xf32>
    %76 = vector.extract_strided_slice %37 {offsets = [0, 384], sizes = [8, 128], strides = [1, 1]} : vector<8x512xf32> to vector<8x128xf32>
    %77 = arith.mulf %66, %76 : vector<8x128xf32>
    %78 = arith.addf %75, %77 : vector<8x128xf32>
    %79 = math.tanh %78 : vector<8x128xf32>
    %cst_46 = arith.constant 1.000000e+00 : f32
    %80 = vector.broadcast %cst_46 : f32 to vector<8x128xf32>
    %81 = arith.subf %80, %74 : vector<8x128xf32>
    %82 = arith.mulf %81, %79 : vector<8x128xf32>
    %83 = arith.mulf %74, %33 : vector<8x128xf32>
    %84 = arith.addf %82, %83 : vector<8x128xf32>
    %85 = arith.subf %84, %33 : vector<8x128xf32>
    %cst_47 = arith.constant dense<0.000000e+00> : vector<8x128xf32>
    %86 = tpu.matmul %21, %85, %cst_47 {dimension_numbers = #tpu.dot_dimension_numbers<[0], [0], [1], [1], [0, 1, 1, 1], [], []>} : vector<8x8xf32>, vector<8x128xf32>, vector<8x128xf32> -> vector<8x128xf32>
    %87 = arith.addf %32, %86 : vector<8x128xf32>
    %c3_i32_48 = arith.constant 3 : i32
    %88 = arith.muli %arg0, %c3_i32_48 : i32
    %c1_i32_49 = arith.constant 1 : i32
    %89 = arith.addi %88, %c1_i32_49 : i32
    %c1 = arith.constant 1 : index
    %c0_50 = arith.constant 0 : index
    %c0_51 = arith.constant 0 : index
    %90 = vector.load %arg14[%c1, %c0_50, %c0_51] : memref<3x8x128xf32, #tpu.memory_space<vmem>>, vector<1x8x128xf32>
    %91 = vector.shape_cast %90 : vector<1x8x128xf32> to vector<8x128xf32>
    %c1_52 = arith.constant 1 : index
    %c0_53 = arith.constant 0 : index
    %c0_54 = arith.constant 0 : index
    %92 = vector.load %arg15[%c1_52, %c0_53, %c0_54] : memref<3x8x128xf32, #tpu.memory_space<vmem>>, vector<1x8x128xf32>
    %93 = vector.shape_cast %92 : vector<1x8x128xf32> to vector<8x128xf32>
    %c1_55 = arith.constant 1 : index
    %c0_56 = arith.constant 0 : index
    %c0_57 = arith.constant 0 : index
    %94 = vector.load %arg17[%c1_55, %c0_56, %c0_57] : memref<3x8x8xf32, #tpu.memory_space<vmem>>, vector<1x8x8xf32>
    %95 = vector.shape_cast %94 : vector<1x8x8xf32> to vector<8x8xf32>
    %c1_58 = arith.constant 1 : index
    %c0_59 = arith.constant 0 : index
    %c0_60 = arith.constant 0 : index
    %96 = vector.load %arg16[%c1_58, %c0_59, %c0_60] : memref<3x8x8xf32, #tpu.memory_space<vmem>>, vector<1x8x8xf32>
    %97 = vector.shape_cast %96 : vector<1x8x8xf32> to vector<8x8xf32>
    %c0_61 = arith.constant 0 : index
    %c0_62 = arith.constant 0 : index
    %98 = vector.load %arg12[%c0_61, %c0_62] : memref<8x384xf32, #tpu.memory_space<vmem>>, vector<8x384xf32>
    %cst_63 = arith.constant dense<0.000000e+00> : vector<8x384xf32>
    %99 = tpu.matmul %97, %98, %cst_63 {dimension_numbers = #tpu.dot_dimension_numbers<[1], [0], [0], [1], [0, 0, 1, 1], [], []>} : vector<8x8xf32>, vector<8x384xf32>, vector<8x384xf32> -> vector<8x384xf32>
    %100 = vector.broadcast %8 : vector<1x384xf32> to vector<8x384xf32>
    %101 = arith.addf %99, %100 : vector<8x384xf32>
    %102 = arith.index_cast %89 : i32 to index
    %103 = memref.load %arg1[%102] : memref<3xi32, #tpu.memory_space<smem>>
    %cst_64 = arith.constant 5.000000e-01 : f32
    %c0_i32_65 = arith.constant 0 : i32
    %104 = arith.subi %103, %c0_i32_65 : i32
    %105 = arith.addi %c0_i32_65, %104 : i32
    %c1_i32_66 = arith.constant 1 : i32
    %106 = scf.for %arg20 = %c0_i32_65 to %105 step %c1_i32_66 iter_args(%arg21 = %87) -> (vector<8x128xf32>)  : i32 {
      %c0_136 = arith.constant 0 : index
      %c0_137 = arith.constant 0 : index
      %261 = vector.load %arg2[%c0_136, %c0_137] : memref<128x128xf32, #tpu.memory_space<vmem>>, vector<128x128xf32>
      %cst_138 = arith.constant dense<0.000000e+00> : vector<8x128xf32>
      %262 = tpu.matmul %arg21, %261, %cst_138 {dimension_numbers = #tpu.dot_dimension_numbers<[1], [0], [0], [1], [0, 0, 1, 1], [], []>} : vector<8x128xf32>, vector<128x128xf32>, vector<8x128xf32> -> vector<8x128xf32>
      %263 = vector.broadcast %3 : vector<1x128xf32> to vector<8x128xf32>
      %264 = arith.addf %262, %263 : vector<8x128xf32>
      %265 = math.tanh %264 : vector<8x128xf32>
      %c0_139 = arith.constant 0 : index
      %c0_140 = arith.constant 0 : index
      %266 = vector.load %arg4[%c0_139, %c0_140] : memref<128x128xf32, #tpu.memory_space<vmem>>, vector<128x128xf32>
      %cst_141 = arith.constant dense<0.000000e+00> : vector<8x128xf32>
      %267 = tpu.matmul %265, %266, %cst_141 {dimension_numbers = #tpu.dot_dimension_numbers<[1], [0], [0], [1], [0, 0, 1, 1], [], []>} : vector<8x128xf32>, vector<128x128xf32>, vector<8x128xf32> -> vector<8x128xf32>
      %268 = vector.broadcast %4 : vector<1x128xf32> to vector<8x128xf32>
      %269 = arith.addf %267, %268 : vector<8x128xf32>
      %270 = math.tanh %269 : vector<8x128xf32>
      %c0_142 = arith.constant 0 : index
      %c0_143 = arith.constant 0 : index
      %271 = vector.load %arg6[%c0_142, %c0_143] : memref<128x128xf32, #tpu.memory_space<vmem>>, vector<128x128xf32>
      %cst_144 = arith.constant dense<0.000000e+00> : vector<8x128xf32>
      %272 = tpu.matmul %270, %271, %cst_144 {dimension_numbers = #tpu.dot_dimension_numbers<[1], [0], [0], [1], [0, 0, 1, 1], [], []>} : vector<8x128xf32>, vector<128x128xf32>, vector<8x128xf32> -> vector<8x128xf32>
      %273 = vector.broadcast %5 : vector<1x128xf32> to vector<8x128xf32>
      %274 = arith.addf %272, %273 : vector<8x128xf32>
      %275 = vector.broadcast %cst_64 : f32 to vector<8x128xf32>
      %276 = arith.mulf %275, %274 : vector<8x128xf32>
      %277 = arith.addf %arg21, %276 : vector<8x128xf32>
      scf.yield %277 : vector<8x128xf32>
    }
    %cst_67 = arith.constant dense<0.000000e+00> : vector<8x128xf32>
    %107 = tpu.matmul %95, %106, %cst_67 {dimension_numbers = #tpu.dot_dimension_numbers<[1], [0], [0], [1], [0, 0, 1, 1], [], []>} : vector<8x8xf32>, vector<8x128xf32>, vector<8x128xf32> -> vector<8x128xf32>
    %c0_68 = arith.constant 0 : index
    %c0_69 = arith.constant 0 : index
    %108 = vector.load %arg8[%c0_68, %c0_69] : memref<128x512xf32, #tpu.memory_space<vmem>>, vector<128x512xf32>
    %cst_70 = arith.constant dense<0.000000e+00> : vector<8x512xf32>
    %109 = tpu.matmul %107, %108, %cst_70 {dimension_numbers = #tpu.dot_dimension_numbers<[1], [0], [0], [1], [0, 0, 1, 1], [], []>} : vector<8x128xf32>, vector<128x512xf32>, vector<8x512xf32> -> vector<8x512xf32>
    %110 = vector.broadcast %6 : vector<1x512xf32> to vector<8x512xf32>
    %111 = arith.addf %109, %110 : vector<8x512xf32>
    %112 = vector.extract_strided_slice %111 {offsets = [0, 0], sizes = [8, 128], strides = [1, 1]} : vector<8x512xf32> to vector<8x128xf32>
    %cst_71 = arith.constant 0.000000e+00 : f32
    %113 = vector.broadcast %cst_71 : f32 to vector<8x128xf32>
    %114 = arith.maximumf %112, %113 : vector<8x128xf32>
    %c0_72 = arith.constant 0 : index
    %c0_73 = arith.constant 0 : index
    %115 = vector.load %arg10[%c0_72, %c0_73] : memref<128x128xf32, #tpu.memory_space<vmem>>, vector<128x128xf32>
    %cst_74 = arith.constant dense<0.000000e+00> : vector<8x128xf32>
    %116 = tpu.matmul %114, %115, %cst_74 {dimension_numbers = #tpu.dot_dimension_numbers<[1], [0], [0], [1], [0, 0, 1, 1], [], []>} : vector<8x128xf32>, vector<128x128xf32>, vector<8x128xf32> -> vector<8x128xf32>
    %117 = vector.broadcast %7 : vector<1x128xf32> to vector<8x128xf32>
    %118 = arith.addf %116, %117 : vector<8x128xf32>
    %119 = arith.subf %91, %118 : vector<8x128xf32>
    %120 = arith.mulf %119, %119 : vector<8x128xf32>
    %121 = arith.mulf %120, %93 : vector<8x128xf32>
    %122 = arith.addf %48, %121 : vector<8x128xf32>
    %123 = math.absf %119 : vector<8x128xf32>
    %124 = arith.mulf %123, %93 : vector<8x128xf32>
    %125 = arith.addf %51, %124 : vector<8x128xf32>
    %126 = math.absf %119 : vector<8x128xf32>
    %cst_75 = arith.constant 9.99999993E-9 : f32
    %127 = vector.broadcast %cst_75 : f32 to vector<8x128xf32>
    %128 = arith.addf %91, %127 : vector<8x128xf32>
    %129 = arith.divf %126, %128 : vector<8x128xf32>
    %130 = arith.mulf %129, %93 : vector<8x128xf32>
    %131 = arith.addf %57, %130 : vector<8x128xf32>
    %132 = arith.addf %58, %93 : vector<8x128xf32>
    %133 = vector.extract_strided_slice %101 {offsets = [0, 0], sizes = [8, 128], strides = [1, 1]} : vector<8x384xf32> to vector<8x128xf32>
    %134 = vector.extract_strided_slice %111 {offsets = [0, 128], sizes = [8, 128], strides = [1, 1]} : vector<8x512xf32> to vector<8x128xf32>
    %135 = arith.addf %133, %134 : vector<8x128xf32>
    %136 = arith.negf %135 : vector<8x128xf32>
    %137 = math.exp %136 : vector<8x128xf32>
    %cst_76 = arith.constant 1.000000e+00 : f32
    %138 = vector.broadcast %cst_76 : f32 to vector<8x128xf32>
    %139 = arith.addf %138, %137 : vector<8x128xf32>
    %140 = arith.divf %138, %139 : vector<8x128xf32>
    %141 = vector.extract_strided_slice %101 {offsets = [0, 128], sizes = [8, 128], strides = [1, 1]} : vector<8x384xf32> to vector<8x128xf32>
    %142 = vector.extract_strided_slice %111 {offsets = [0, 256], sizes = [8, 128], strides = [1, 1]} : vector<8x512xf32> to vector<8x128xf32>
    %143 = arith.addf %141, %142 : vector<8x128xf32>
    %144 = arith.negf %143 : vector<8x128xf32>
    %145 = math.exp %144 : vector<8x128xf32>
    %cst_77 = arith.constant 1.000000e+00 : f32
    %146 = vector.broadcast %cst_77 : f32 to vector<8x128xf32>
    %147 = arith.addf %146, %145 : vector<8x128xf32>
    %148 = arith.divf %146, %147 : vector<8x128xf32>
    %149 = vector.extract_strided_slice %101 {offsets = [0, 256], sizes = [8, 128], strides = [1, 1]} : vector<8x384xf32> to vector<8x128xf32>
    %150 = vector.extract_strided_slice %111 {offsets = [0, 384], sizes = [8, 128], strides = [1, 1]} : vector<8x512xf32> to vector<8x128xf32>
    %151 = arith.mulf %140, %150 : vector<8x128xf32>
    %152 = arith.addf %149, %151 : vector<8x128xf32>
    %153 = math.tanh %152 : vector<8x128xf32>
    %cst_78 = arith.constant 1.000000e+00 : f32
    %154 = vector.broadcast %cst_78 : f32 to vector<8x128xf32>
    %155 = arith.subf %154, %148 : vector<8x128xf32>
    %156 = arith.mulf %155, %153 : vector<8x128xf32>
    %157 = arith.mulf %148, %107 : vector<8x128xf32>
    %158 = arith.addf %156, %157 : vector<8x128xf32>
    %159 = arith.subf %158, %107 : vector<8x128xf32>
    %cst_79 = arith.constant dense<0.000000e+00> : vector<8x128xf32>
    %160 = tpu.matmul %95, %159, %cst_79 {dimension_numbers = #tpu.dot_dimension_numbers<[0], [0], [1], [1], [0, 1, 1, 1], [], []>} : vector<8x8xf32>, vector<8x128xf32>, vector<8x128xf32> -> vector<8x128xf32>
    %161 = arith.addf %106, %160 : vector<8x128xf32>
    %c3_i32_80 = arith.constant 3 : i32
    %162 = arith.muli %arg0, %c3_i32_80 : i32
    %c2_i32 = arith.constant 2 : i32
    %163 = arith.addi %162, %c2_i32 : i32
    %c2 = arith.constant 2 : index
    %c0_81 = arith.constant 0 : index
    %c0_82 = arith.constant 0 : index
    %164 = vector.load %arg14[%c2, %c0_81, %c0_82] : memref<3x8x128xf32, #tpu.memory_space<vmem>>, vector<1x8x128xf32>
    %165 = vector.shape_cast %164 : vector<1x8x128xf32> to vector<8x128xf32>
    %c2_83 = arith.constant 2 : index
    %c0_84 = arith.constant 0 : index
    %c0_85 = arith.constant 0 : index
    %166 = vector.load %arg15[%c2_83, %c0_84, %c0_85] : memref<3x8x128xf32, #tpu.memory_space<vmem>>, vector<1x8x128xf32>
    %167 = vector.shape_cast %166 : vector<1x8x128xf32> to vector<8x128xf32>
    %c2_86 = arith.constant 2 : index
    %c0_87 = arith.constant 0 : index
    %c0_88 = arith.constant 0 : index
    %168 = vector.load %arg17[%c2_86, %c0_87, %c0_88] : memref<3x8x8xf32, #tpu.memory_space<vmem>>, vector<1x8x8xf32>
    %169 = vector.shape_cast %168 : vector<1x8x8xf32> to vector<8x8xf32>
    %c2_89 = arith.constant 2 : index
    %c0_90 = arith.constant 0 : index
    %c0_91 = arith.constant 0 : index
    %170 = vector.load %arg16[%c2_89, %c0_90, %c0_91] : memref<3x8x8xf32, #tpu.memory_space<vmem>>, vector<1x8x8xf32>
    %171 = vector.shape_cast %170 : vector<1x8x8xf32> to vector<8x8xf32>
    %c0_92 = arith.constant 0 : index
    %c0_93 = arith.constant 0 : index
    %172 = vector.load %arg12[%c0_92, %c0_93] : memref<8x384xf32, #tpu.memory_space<vmem>>, vector<8x384xf32>
    %cst_94 = arith.constant dense<0.000000e+00> : vector<8x384xf32>
    %173 = tpu.matmul %171, %172, %cst_94 {dimension_numbers = #tpu.dot_dimension_numbers<[1], [0], [0], [1], [0, 0, 1, 1], [], []>} : vector<8x8xf32>, vector<8x384xf32>, vector<8x384xf32> -> vector<8x384xf32>
    %174 = vector.broadcast %8 : vector<1x384xf32> to vector<8x384xf32>
    %175 = arith.addf %173, %174 : vector<8x384xf32>
    %176 = arith.index_cast %163 : i32 to index
    %177 = memref.load %arg1[%176] : memref<3xi32, #tpu.memory_space<smem>>
    %cst_95 = arith.constant 5.000000e-01 : f32
    %c0_i32_96 = arith.constant 0 : i32
    %178 = arith.subi %177, %c0_i32_96 : i32
    %179 = arith.addi %c0_i32_96, %178 : i32
    %c1_i32_97 = arith.constant 1 : i32
    %180 = scf.for %arg20 = %c0_i32_96 to %179 step %c1_i32_97 iter_args(%arg21 = %161) -> (vector<8x128xf32>)  : i32 {
      %c0_136 = arith.constant 0 : index
      %c0_137 = arith.constant 0 : index
      %261 = vector.load %arg2[%c0_136, %c0_137] : memref<128x128xf32, #tpu.memory_space<vmem>>, vector<128x128xf32>
      %cst_138 = arith.constant dense<0.000000e+00> : vector<8x128xf32>
      %262 = tpu.matmul %arg21, %261, %cst_138 {dimension_numbers = #tpu.dot_dimension_numbers<[1], [0], [0], [1], [0, 0, 1, 1], [], []>} : vector<8x128xf32>, vector<128x128xf32>, vector<8x128xf32> -> vector<8x128xf32>
      %263 = vector.broadcast %3 : vector<1x128xf32> to vector<8x128xf32>
      %264 = arith.addf %262, %263 : vector<8x128xf32>
      %265 = math.tanh %264 : vector<8x128xf32>
      %c0_139 = arith.constant 0 : index
      %c0_140 = arith.constant 0 : index
      %266 = vector.load %arg4[%c0_139, %c0_140] : memref<128x128xf32, #tpu.memory_space<vmem>>, vector<128x128xf32>
      %cst_141 = arith.constant dense<0.000000e+00> : vector<8x128xf32>
      %267 = tpu.matmul %265, %266, %cst_141 {dimension_numbers = #tpu.dot_dimension_numbers<[1], [0], [0], [1], [0, 0, 1, 1], [], []>} : vector<8x128xf32>, vector<128x128xf32>, vector<8x128xf32> -> vector<8x128xf32>
      %268 = vector.broadcast %4 : vector<1x128xf32> to vector<8x128xf32>
      %269 = arith.addf %267, %268 : vector<8x128xf32>
      %270 = math.tanh %269 : vector<8x128xf32>
      %c0_142 = arith.constant 0 : index
      %c0_143 = arith.constant 0 : index
      %271 = vector.load %arg6[%c0_142, %c0_143] : memref<128x128xf32, #tpu.memory_space<vmem>>, vector<128x128xf32>
      %cst_144 = arith.constant dense<0.000000e+00> : vector<8x128xf32>
      %272 = tpu.matmul %270, %271, %cst_144 {dimension_numbers = #tpu.dot_dimension_numbers<[1], [0], [0], [1], [0, 0, 1, 1], [], []>} : vector<8x128xf32>, vector<128x128xf32>, vector<8x128xf32> -> vector<8x128xf32>
      %273 = vector.broadcast %5 : vector<1x128xf32> to vector<8x128xf32>
      %274 = arith.addf %272, %273 : vector<8x128xf32>
      %275 = vector.broadcast %cst_95 : f32 to vector<8x128xf32>
      %276 = arith.mulf %275, %274 : vector<8x128xf32>
      %277 = arith.addf %arg21, %276 : vector<8x128xf32>
      scf.yield %277 : vector<8x128xf32>
    }
    %cst_98 = arith.constant dense<0.000000e+00> : vector<8x128xf32>
    %181 = tpu.matmul %169, %180, %cst_98 {dimension_numbers = #tpu.dot_dimension_numbers<[1], [0], [0], [1], [0, 0, 1, 1], [], []>} : vector<8x8xf32>, vector<8x128xf32>, vector<8x128xf32> -> vector<8x128xf32>
    %c0_99 = arith.constant 0 : index
    %c0_100 = arith.constant 0 : index
    %182 = vector.load %arg8[%c0_99, %c0_100] : memref<128x512xf32, #tpu.memory_space<vmem>>, vector<128x512xf32>
    %cst_101 = arith.constant dense<0.000000e+00> : vector<8x512xf32>
    %183 = tpu.matmul %181, %182, %cst_101 {dimension_numbers = #tpu.dot_dimension_numbers<[1], [0], [0], [1], [0, 0, 1, 1], [], []>} : vector<8x128xf32>, vector<128x512xf32>, vector<8x512xf32> -> vector<8x512xf32>
    %184 = vector.broadcast %6 : vector<1x512xf32> to vector<8x512xf32>
    %185 = arith.addf %183, %184 : vector<8x512xf32>
    %186 = vector.extract_strided_slice %185 {offsets = [0, 0], sizes = [8, 128], strides = [1, 1]} : vector<8x512xf32> to vector<8x128xf32>
    %cst_102 = arith.constant 0.000000e+00 : f32
    %187 = vector.broadcast %cst_102 : f32 to vector<8x128xf32>
    %188 = arith.maximumf %186, %187 : vector<8x128xf32>
    %c0_103 = arith.constant 0 : index
    %c0_104 = arith.constant 0 : index
    %189 = vector.load %arg10[%c0_103, %c0_104] : memref<128x128xf32, #tpu.memory_space<vmem>>, vector<128x128xf32>
    %cst_105 = arith.constant dense<0.000000e+00> : vector<8x128xf32>
    %190 = tpu.matmul %188, %189, %cst_105 {dimension_numbers = #tpu.dot_dimension_numbers<[1], [0], [0], [1], [0, 0, 1, 1], [], []>} : vector<8x128xf32>, vector<128x128xf32>, vector<8x128xf32> -> vector<8x128xf32>
    %191 = vector.broadcast %7 : vector<1x128xf32> to vector<8x128xf32>
    %192 = arith.addf %190, %191 : vector<8x128xf32>
    %193 = arith.subf %165, %192 : vector<8x128xf32>
    %194 = arith.mulf %193, %193 : vector<8x128xf32>
    %195 = arith.mulf %194, %167 : vector<8x128xf32>
    %196 = arith.addf %122, %195 : vector<8x128xf32>
    %197 = math.absf %193 : vector<8x128xf32>
    %198 = arith.mulf %197, %167 : vector<8x128xf32>
    %199 = arith.addf %125, %198 : vector<8x128xf32>
    %200 = math.absf %193 : vector<8x128xf32>
    %cst_106 = arith.constant 9.99999993E-9 : f32
    %201 = vector.broadcast %cst_106 : f32 to vector<8x128xf32>
    %202 = arith.addf %165, %201 : vector<8x128xf32>
    %203 = arith.divf %200, %202 : vector<8x128xf32>
    %204 = arith.mulf %203, %167 : vector<8x128xf32>
    %205 = arith.addf %131, %204 : vector<8x128xf32>
    %206 = arith.addf %132, %167 : vector<8x128xf32>
    %207 = vector.extract_strided_slice %175 {offsets = [0, 0], sizes = [8, 128], strides = [1, 1]} : vector<8x384xf32> to vector<8x128xf32>
    %208 = vector.extract_strided_slice %185 {offsets = [0, 128], sizes = [8, 128], strides = [1, 1]} : vector<8x512xf32> to vector<8x128xf32>
    %209 = arith.addf %207, %208 : vector<8x128xf32>
    %210 = arith.negf %209 : vector<8x128xf32>
    %211 = math.exp %210 : vector<8x128xf32>
    %cst_107 = arith.constant 1.000000e+00 : f32
    %212 = vector.broadcast %cst_107 : f32 to vector<8x128xf32>
    %213 = arith.addf %212, %211 : vector<8x128xf32>
    %214 = arith.divf %212, %213 : vector<8x128xf32>
    %215 = vector.extract_strided_slice %175 {offsets = [0, 128], sizes = [8, 128], strides = [1, 1]} : vector<8x384xf32> to vector<8x128xf32>
    %216 = vector.extract_strided_slice %185 {offsets = [0, 256], sizes = [8, 128], strides = [1, 1]} : vector<8x512xf32> to vector<8x128xf32>
    %217 = arith.addf %215, %216 : vector<8x128xf32>
    %218 = arith.negf %217 : vector<8x128xf32>
    %219 = math.exp %218 : vector<8x128xf32>
    %cst_108 = arith.constant 1.000000e+00 : f32
    %220 = vector.broadcast %cst_108 : f32 to vector<8x128xf32>
    %221 = arith.addf %220, %219 : vector<8x128xf32>
    %222 = arith.divf %220, %221 : vector<8x128xf32>
    %223 = vector.extract_strided_slice %175 {offsets = [0, 256], sizes = [8, 128], strides = [1, 1]} : vector<8x384xf32> to vector<8x128xf32>
    %224 = vector.extract_strided_slice %185 {offsets = [0, 384], sizes = [8, 128], strides = [1, 1]} : vector<8x512xf32> to vector<8x128xf32>
    %225 = arith.mulf %214, %224 : vector<8x128xf32>
    %226 = arith.addf %223, %225 : vector<8x128xf32>
    %227 = math.tanh %226 : vector<8x128xf32>
    %cst_109 = arith.constant 1.000000e+00 : f32
    %228 = vector.broadcast %cst_109 : f32 to vector<8x128xf32>
    %229 = arith.subf %228, %222 : vector<8x128xf32>
    %230 = arith.mulf %229, %227 : vector<8x128xf32>
    %231 = arith.mulf %222, %181 : vector<8x128xf32>
    %232 = arith.addf %230, %231 : vector<8x128xf32>
    %233 = arith.subf %232, %181 : vector<8x128xf32>
    %cst_110 = arith.constant dense<0.000000e+00> : vector<8x128xf32>
    %234 = tpu.matmul %169, %233, %cst_110 {dimension_numbers = #tpu.dot_dimension_numbers<[0], [0], [1], [1], [0, 1, 1, 1], [], []>} : vector<8x8xf32>, vector<8x128xf32>, vector<8x128xf32> -> vector<8x128xf32>
    %235 = arith.addf %180, %234 : vector<8x128xf32>
    %c0_111 = arith.constant 0 : index
    %c0_112 = arith.constant 0 : index
    %236 = vector.load %arg19[%c0_111, %c0_112] : memref<8x128xf32, #tpu.memory_space<vmem>>, vector<8x128xf32>
    tpu.vector_store %arg19[%c0_111, %c0_112], %235 {strides = array<i32>} : memref<8x128xf32, #tpu.memory_space<vmem>>, vector<8x128xf32>,
    %c0_113 = arith.constant 0 : index
    %c0_114 = arith.constant 0 : index
    %c0_115 = arith.constant 0 : index
    %237 = vector.load %arg18[%c0_113, %c0_114, %c0_115] : memref<4x8x128xf32, #tpu.memory_space<vmem>>, vector<1x8x128xf32>
    %238 = vector.shape_cast %237 : vector<1x8x128xf32> to vector<8x128xf32>
    %239 = arith.addf %238, %196 : vector<8x128xf32>
    %c0_116 = arith.constant 0 : index
    %c0_117 = arith.constant 0 : index
    %c0_118 = arith.constant 0 : index
    %240 = vector.load %arg18[%c0_116, %c0_117, %c0_118] : memref<4x8x128xf32, #tpu.memory_space<vmem>>, vector<1x8x128xf32>
    %241 = vector.shape_cast %240 : vector<1x8x128xf32> to vector<8x128xf32>
    %242 = vector.shape_cast %239 : vector<8x128xf32> to vector<1x8x128xf32>
    tpu.vector_store %arg18[%c0_116, %c0_117, %c0_118], %242 {strides = array<i32>} : memref<4x8x128xf32, #tpu.memory_space<vmem>>, vector<1x8x128xf32>,
    %c1_119 = arith.constant 1 : index
    %c0_120 = arith.constant 0 : index
    %c0_121 = arith.constant 0 : index
    %243 = vector.load %arg18[%c1_119, %c0_120, %c0_121] : memref<4x8x128xf32, #tpu.memory_space<vmem>>, vector<1x8x128xf32>
    %244 = vector.shape_cast %243 : vector<1x8x128xf32> to vector<8x128xf32>
    %245 = arith.addf %244, %199 : vector<8x128xf32>
    %c1_122 = arith.constant 1 : index
    %c0_123 = arith.constant 0 : index
    %c0_124 = arith.constant 0 : index
    %246 = vector.load %arg18[%c1_122, %c0_123, %c0_124] : memref<4x8x128xf32, #tpu.memory_space<vmem>>, vector<1x8x128xf32>
    %247 = vector.shape_cast %246 : vector<1x8x128xf32> to vector<8x128xf32>
    %248 = vector.shape_cast %245 : vector<8x128xf32> to vector<1x8x128xf32>
    tpu.vector_store %arg18[%c1_122, %c0_123, %c0_124], %248 {strides = array<i32>} : memref<4x8x128xf32, #tpu.memory_space<vmem>>, vector<1x8x128xf32>,
    %c2_125 = arith.constant 2 : index
    %c0_126 = arith.constant 0 : index
    %c0_127 = arith.constant 0 : index
    %249 = vector.load %arg18[%c2_125, %c0_126, %c0_127] : memref<4x8x128xf32, #tpu.memory_space<vmem>>, vector<1x8x128xf32>
    %250 = vector.shape_cast %249 : vector<1x8x128xf32> to vector<8x128xf32>
    %251 = arith.addf %250, %205 : vector<8x128xf32>
    %c2_128 = arith.constant 2 : index
    %c0_129 = arith.constant 0 : index
    %c0_130 = arith.constant 0 : index
    %252 = vector.load %arg18[%c2_128, %c0_129, %c0_130] : memref<4x8x128xf32, #tpu.memory_space<vmem>>, vector<1x8x128xf32>
    %253 = vector.shape_cast %252 : vector<1x8x128xf32> to vector<8x128xf32>
    %254 = vector.shape_cast %251 : vector<8x128xf32> to vector<1x8x128xf32>
    tpu.vector_store %arg18[%c2_128, %c0_129, %c0_130], %254 {strides = array<i32>} : memref<4x8x128xf32, #tpu.memory_space<vmem>>, vector<1x8x128xf32>,
    %c3 = arith.constant 3 : index
    %c0_131 = arith.constant 0 : index
    %c0_132 = arith.constant 0 : index
    %255 = vector.load %arg18[%c3, %c0_131, %c0_132] : memref<4x8x128xf32, #tpu.memory_space<vmem>>, vector<1x8x128xf32>
    %256 = vector.shape_cast %255 : vector<1x8x128xf32> to vector<8x128xf32>
    %257 = arith.addf %256, %206 : vector<8x128xf32>
    %c3_133 = arith.constant 3 : index
    %c0_134 = arith.constant 0 : index
    %c0_135 = arith.constant 0 : index
    %258 = vector.load %arg18[%c3_133, %c0_134, %c0_135] : memref<4x8x128xf32, #tpu.memory_space<vmem>>, vector<1x8x128xf32>
    %259 = vector.shape_cast %258 : vector<1x8x128xf32> to vector<8x128xf32>
    %260 = vector.shape_cast %257 : vector<8x128xf32> to vector<1x8x128xf32>
    tpu.vector_store %arg18[%c3_133, %c0_134, %c0_135], %260 {strides = array<i32>} : memref<4x8x128xf32, #tpu.memory_space<vmem>>, vector<1x8x128xf32>,
    return
  }
  func.func @transform_0(%arg0: i32, %arg1: memref<3xi32, #tpu.memory_space<smem>>) -> (i32, i32) {
    %c0_i32 = arith.constant 0 : i32
    %c0_i32_0 = arith.constant 0 : i32
    %c0_i32_1 = arith.constant 0 : i32
    return %c0_i32, %c0_i32_0 : i32, i32
  }
  func.func @transform_1(%arg0: i32, %arg1: memref<3xi32, #tpu.memory_space<smem>>) -> (i32, i32) {
    %c0_i32 = arith.constant 0 : i32
    %c0_i32_0 = arith.constant 0 : i32
    %c0_i32_1 = arith.constant 0 : i32
    return %c0_i32, %c0_i32_0 : i32, i32
  }
  func.func @transform_2(%arg0: i32, %arg1: memref<3xi32, #tpu.memory_space<smem>>) -> (i32, i32) {
    %c0_i32 = arith.constant 0 : i32
    %c0_i32_0 = arith.constant 0 : i32
    %c0_i32_1 = arith.constant 0 : i32
    return %c0_i32, %c0_i32_0 : i32, i32
  }
  func.func @transform_3(%arg0: i32, %arg1: memref<3xi32, #tpu.memory_space<smem>>) -> (i32, i32) {
    %c0_i32 = arith.constant 0 : i32
    %c0_i32_0 = arith.constant 0 : i32
    %c0_i32_1 = arith.constant 0 : i32
    return %c0_i32, %c0_i32_0 : i32, i32
  }
  func.func @transform_4(%arg0: i32, %arg1: memref<3xi32, #tpu.memory_space<smem>>) -> (i32, i32) {
    %c0_i32 = arith.constant 0 : i32
    %c0_i32_0 = arith.constant 0 : i32
    %c0_i32_1 = arith.constant 0 : i32
    return %c0_i32, %c0_i32_0 : i32, i32
  }
  func.func @transform_5(%arg0: i32, %arg1: memref<3xi32, #tpu.memory_space<smem>>) -> (i32, i32) {
    %c0_i32 = arith.constant 0 : i32
    %c0_i32_0 = arith.constant 0 : i32
    %c0_i32_1 = arith.constant 0 : i32
    return %c0_i32, %c0_i32_0 : i32, i32
  }
  func.func @transform_6(%arg0: i32, %arg1: memref<3xi32, #tpu.memory_space<smem>>) -> (i32, i32) {
    %c0_i32 = arith.constant 0 : i32
    %c0_i32_0 = arith.constant 0 : i32
    %c0_i32_1 = arith.constant 0 : i32
    return %c0_i32, %c0_i32_0 : i32, i32
  }
  func.func @transform_7(%arg0: i32, %arg1: memref<3xi32, #tpu.memory_space<smem>>) -> (i32, i32) {
    %c0_i32 = arith.constant 0 : i32
    %c0_i32_0 = arith.constant 0 : i32
    %c0_i32_1 = arith.constant 0 : i32
    return %c0_i32, %c0_i32_0 : i32, i32
  }
  func.func @transform_8(%arg0: i32, %arg1: memref<3xi32, #tpu.memory_space<smem>>) -> (i32, i32) {
    %c0_i32 = arith.constant 0 : i32
    %c0_i32_0 = arith.constant 0 : i32
    %c0_i32_1 = arith.constant 0 : i32
    return %c0_i32, %c0_i32_0 : i32, i32
  }
  func.func @transform_9(%arg0: i32, %arg1: memref<3xi32, #tpu.memory_space<smem>>) -> (i32, i32) {
    %c0_i32 = arith.constant 0 : i32
    %c0_i32_0 = arith.constant 0 : i32
    %c0_i32_1 = arith.constant 0 : i32
    return %c0_i32, %c0_i32_0 : i32, i32
  }
  func.func @transform_10(%arg0: i32, %arg1: memref<3xi32, #tpu.memory_space<smem>>) -> (i32, i32) {
    %c0_i32 = arith.constant 0 : i32
    %c0_i32_0 = arith.constant 0 : i32
    %c0_i32_1 = arith.constant 0 : i32
    return %c0_i32, %c0_i32_0 : i32, i32
  }
  func.func @transform_11(%arg0: i32, %arg1: memref<3xi32, #tpu.memory_space<smem>>) -> (i32, i32) {
    %c0_i32 = arith.constant 0 : i32
    %c0_i32_0 = arith.constant 0 : i32
    %c0_i32_1 = arith.constant 0 : i32
    return %c0_i32, %c0_i32_0 : i32, i32
  }
  func.func @transform_12(%arg0: i32, %arg1: memref<3xi32, #tpu.memory_space<smem>>) -> (i32, i32, i32) {
    %c0_i32 = arith.constant 0 : i32
    %c0_i32_0 = arith.constant 0 : i32
    %c0_i32_1 = arith.constant 0 : i32
    return %arg0, %c0_i32, %c0_i32_0 : i32, i32, i32
  }
  func.func @transform_13(%arg0: i32, %arg1: memref<3xi32, #tpu.memory_space<smem>>) -> (i32, i32, i32) {
    %c0_i32 = arith.constant 0 : i32
    %c0_i32_0 = arith.constant 0 : i32
    %c0_i32_1 = arith.constant 0 : i32
    return %arg0, %c0_i32, %c0_i32_0 : i32, i32, i32
  }
  func.func @transform_14(%arg0: i32, %arg1: memref<3xi32, #tpu.memory_space<smem>>) -> (i32, i32, i32) {
    %c0_i32 = arith.constant 0 : i32
    %c0_i32_0 = arith.constant 0 : i32
    %c0_i32_1 = arith.constant 0 : i32
    return %arg0, %c0_i32, %c0_i32_0 : i32, i32, i32
  }
  func.func @transform_15(%arg0: i32, %arg1: memref<3xi32, #tpu.memory_space<smem>>) -> (i32, i32, i32) {
    %c0_i32 = arith.constant 0 : i32
    %c0_i32_0 = arith.constant 0 : i32
    %c0_i32_1 = arith.constant 0 : i32
    return %arg0, %c0_i32, %c0_i32_0 : i32, i32, i32
  }
  func.func @transform_16(%arg0: i32, %arg1: memref<3xi32, #tpu.memory_space<smem>>) -> (i32, i32, i32) {
    %c0_i32 = arith.constant 0 : i32
    %c0_i32_0 = arith.constant 0 : i32
    %c0_i32_1 = arith.constant 0 : i32
    %c0_i32_2 = arith.constant 0 : i32
    return %c0_i32, %c0_i32_0, %c0_i32_1 : i32, i32, i32
  }
}

</mosaic_0001>

<llo_original>
// kernel: tpu_custom_call.1
$region0: #{tpu_custom_call.1}
  #allocation0 [shape = 'u32[]', space=smem, size = 0x4, offset = 0x4, fixed_abs, tag = 'smem constant byte address 0x4 - core index']
  #allocation1 [shape = 'u32[72,128]{1,0:T(1,128)}', space=vmem, size = 0x9000, scoped, tag = 'internal scratch']
  #allocation2 [shape = 'f32[8,128]{1,0:T(8,128)}', space=vmem, size = 0x1000, scoped, tag = 'scratch operand']
  #allocation3 [shape = 's32[1]{0}', space=sflag, size = 0x4, scoped, tag = 'scoped memory for tpu_custom_call.1']
  #allocation4 [shape = 'u8[512]{0}', space=smem, size = 0x200, scoped, tag = 'prefetched SMEM operand 0']
  %s0 = inlined_call_operand.hbm [shape: s32[3], index: 0, kind: input, shape index: {}]
  %s1 = inlined_call_operand.hbm [shape: f32[128,128], index: 1, kind: input, shape index: {}]
  %s2 = inlined_call_operand.hbm [shape: f32[1,128], index: 2, kind: input, shape index: {}]
  %s3 = inlined_call_operand.hbm [shape: f32[128,128], index: 3, kind: input, shape index: {}]
  %s4 = inlined_call_operand.hbm [shape: f32[1,128], index: 4, kind: input, shape index: {}]
  %s5 = inlined_call_operand.hbm [shape: f32[128,128], index: 5, kind: input, shape index: {}]
  %s6 = inlined_call_operand.hbm [shape: f32[1,128], index: 6, kind: input, shape index: {}]
  %s7 = inlined_call_operand.hbm [shape: f32[128,512], index: 7, kind: input, shape index: {}]
  %s8 = inlined_call_operand.vmem [shape: f32[1,512], index: 8, kind: input, shape index: {}]
  %s9 = inlined_call_operand.hbm [shape: f32[128,128], index: 9, kind: input, shape index: {}]
  %s10 = inlined_call_operand.vmem [shape: f32[1,128], index: 10, kind: input, shape index: {}]
  %s11 = inlined_call_operand.hbm [shape: f32[8,384], index: 11, kind: input, shape index: {}]
  %s12 = inlined_call_operand.vmem [shape: f32[1,384], index: 12, kind: input, shape index: {}]
  %s13 = inlined_call_operand.hbm [shape: f32[3,8,128], index: 13, kind: input, shape index: {}]
  %s14 = inlined_call_operand.hbm [shape: f32[3,8,128], index: 14, kind: input, shape index: {}]
  %s15 = inlined_call_operand.hbm [shape: f32[3,8,8], index: 15, kind: input, shape index: {}]
  %s16 = inlined_call_operand.hbm [shape: f32[3,8,8], index: 16, kind: input, shape index: {}]
  %s17 = inlined_call_operand.hbm [shape: f32[4,8,128], index: 17, kind: output, shape index: {}]
  %s18 = sld [smem:[#allocation0]]
  $region151: #{tpu_custom_call.1} parent=0
    _
  %s20 = ssub.s32 1, %s18
  %s21 = scalar_select 0, %s20, %s18
  %s23 = sshll.u32 %s0, 4
  %s24 = int_to_ptr.hbm [resolvable:$true] %s23
  %26 = dma.hbm_to_smem %s24, 16, [#allocation4], [#allocation3]
  %28 = dma.done [#allocation3], 16
  %29 = sfence
  $region1: #{tpu_custom_call.1} parent=0
    #allocation5 [shape = 'u8[65536]{0}', space=vmem, size = 0x10000, scoped, tag = 'input window, operand 1, single buffered']
    #allocation6 [shape = 's32[1]{0}', space=sflag, size = 0x4, scoped, tag = 'scoped memory for tpu_custom_call.1']
    #allocation7 [shape = 's32[1]{0}', space=sflag, size = 0x4, scoped, tag = 'scoped memory for tpu_custom_call.1']
    #allocation8 [shape = 'u8[512]{0}', space=vmem, size = 0x400, scoped, tag = 'input window, operand 2, single buffered']
    #allocation9 [shape = 's32[1]{0}', space=sflag, size = 0x4, scoped, tag = 'scoped memory for tpu_custom_call.1']
    #allocation10 [shape = 'u8[65536]{0}', space=vmem, size = 0x10000, scoped, tag = 'input window, operand 3, single buffered']
    #allocation11 [shape = 'u8[512]{0}', space=vmem, size = 0x400, scoped, tag = 'input window, operand 4, single buffered']
    #allocation12 [shape = 's32[1]{0}', space=sflag, size = 0x4, scoped, tag = 'scoped memory for tpu_custom_call.1']
    #allocation13 [shape = 'u8[65536]{0}', space=vmem, size = 0x10000, scoped, tag = 'input window, operand 5, single buffered']
    #allocation14 [shape = 'u8[512]{0}', space=vmem, size = 0x400, scoped, tag = 'input window, operand 6, single buffered']
    #allocation15 [shape = 's32[1]{0}', space=sflag, size = 0x4, scoped, tag = 'scoped memory for tpu_custom_call.1']
    #allocation16 [shape = 'u8[262144]{0}', space=vmem, size = 0x40000, scoped, tag = 'input window, operand 7, single buffered']
    #allocation17 [shape = 'u8[65536]{0}', space=vmem, size = 0x10000, scoped, tag = 'input window, operand 9, single buffered']
    #allocation18 [shape = 's32[1]{0}', space=sflag, size = 0x4, scoped, tag = 'scoped memory for tpu_custom_call.1']
    #allocation19 [shape = 'u8[12288]{0}', space=vmem, size = 0x3000, scoped, tag = 'input window, operand 11, single buffered']
    #allocation20 [shape = 'u8[12288]{0}', space=vmem, size = 0x3000, scoped, tag = 'input window, operand 13, single buffered']
    #allocation21 [shape = 's32[1]{0}', space=sflag, size = 0x4, scoped, tag = 'scoped memory for tpu_custom_call.1']
    #allocation22 [shape = 'u8[12288]{0}', space=vmem, size = 0x3000, scoped, tag = 'input window, operand 14, single buffered']
    #allocation23 [shape = 'u8[12288]{0}', space=vmem, size = 0x3000, scoped, tag = 'input window, operand 15, single buffered']
    #allocation24 [shape = 's32[1]{0}', space=sflag, size = 0x4, scoped, tag = 'scoped memory for tpu_custom_call.1']
    #allocation25 [shape = 'u8[12288]{0}', space=vmem, size = 0x3000, scoped, tag = 'input window, operand 16, single buffered']
    #allocation26 [shape = 'u8[16384]{0}', space=vmem, size = 0x4000, scoped, tag = 'output window, operand 0, single buffered']
    %30 = vsyncpa [#allocation6], 0
    %31 = vsyncpa [#allocation9], 0
    %32 = vsyncpa [#allocation12], 0
    %33 = vsyncpa [#allocation15], 0
    %34 = vsyncpa [#allocation18], 0
    %35 = vsyncpa [#allocation21], 0
    %36 = vsyncpa [#allocation24], 0
    %37 = vsyncpa [#allocation7], 0
    // Predicated region
    $region2: #{tpu_custom_call.1} parent=1 // pred_check
      _
    $region3: #{tpu_custom_call.1} parent=1 // pred_check_branch
      %39 = sbr.rel (0) target = $region5
    $region4: #{tpu_custom_call.1} parent=1 // pred_region
      %41 = vsyncadd [#allocation6], 0
      %s42 = sshll.u32 %s1, 4
      %s43 = int_to_ptr.hbm [resolvable:$true] %s42
      %s44 = sshll.u32 [#allocation5], 4
      %s45 = int_to_ptr.vmem [resolvable:$true] %s44
      %50 = dma.hbm_to_vmem [thread:$0]  %s43, 2048, %s45, [#allocation6], 128, 128, 8
    $region5: #{tpu_custom_call.1} parent=1 // pred_fallthru
      _
    // Predicated region
    $region6: #{tpu_custom_call.1} parent=1 // pred_check
      _
    $region7: #{tpu_custom_call.1} parent=1 // pred_check_branch
      %52 = sbr.rel (0) target = $region9
    $region8: #{tpu_custom_call.1} parent=1 // pred_region
      %54 = vsyncadd [#allocation9], 0
      %s56 = sshll.u32 %s2, 4
      %s57 = int_to_ptr.hbm [resolvable:$true] %s56
      %s58 = sshll.u32 [#allocation8], 4
      %s59 = int_to_ptr.vmem [resolvable:$true] %s58
      %61 = dma.hbm_to_vmem [thread:$0]  %s57, 16, %s59, [#allocation9]
    $region9: #{tpu_custom_call.1} parent=1 // pred_fallthru
      _
    // Predicated region
    $region10: #{tpu_custom_call.1} parent=1 // pred_check
      _
    $region11: #{tpu_custom_call.1} parent=1 // pred_check_branch
      %63 = sbr.rel (0) target = $region13
    $region12: #{tpu_custom_call.1} parent=1 // pred_region
      %65 = vsyncadd [#allocation9], 0
      %s66 = sshll.u32 %s3, 4
      %s67 = int_to_ptr.hbm [resolvable:$true] %s66
      %s68 = sshll.u32 [#allocation10], 4
      %s69 = int_to_ptr.vmem [resolvable:$true] %s68
      %74 = dma.hbm_to_vmem [thread:$0]  %s67, 2048, %s69, [#allocation9], 128, 128, 8
    $region13: #{tpu_custom_call.1} parent=1 // pred_fallthru
      _
    // Predicated region
    $region14: #{tpu_custom_call.1} parent=1 // pred_check
      _
    $region15: #{tpu_custom_call.1} parent=1 // pred_check_branch
      %76 = sbr.rel (0) target = $region17
    $region16: #{tpu_custom_call.1} parent=1 // pred_region
      %78 = vsyncadd [#allocation12], 0
      %s80 = sshll.u32 %s4, 4
      %s81 = int_to_ptr.hbm [resolvable:$true] %s80
      %s82 = sshll.u32 [#allocation11], 4
      %s83 = int_to_ptr.vmem [resolvable:$true] %s82
      %85 = dma.hbm_to_vmem [thread:$0]  %s81, 16, %s83, [#allocation12]
    $region17: #{tpu_custom_call.1} parent=1 // pred_fallthru
      _
    // Predicated region
    $region18: #{tpu_custom_call.1} parent=1 // pred_check
      _
    $region19: #{tpu_custom_call.1} parent=1 // pred_check_branch
      %87 = sbr.rel (0) target = $region21
    $region20: #{tpu_custom_call.1} parent=1 // pred_region
      %89 = vsyncadd [#allocation12], 0
      %s90 = sshll.u32 %s5, 4
      %s91 = int_to_ptr.hbm [resolvable:$true] %s90
      %s92 = sshll.u32 [#allocation13], 4
      %s93 = int_to_ptr.vmem [resolvable:$true] %s92
      %98 = dma.hbm_to_vmem [thread:$0]  %s91, 2048, %s93, [#allocation12], 128, 128, 8
    $region21: #{tpu_custom_call.1} parent=1 // pred_fallthru
      _
    // Predicated region
    $region22: #{tpu_custom_call.1} parent=1 // pred_check
      _
    $region23: #{tpu_custom_call.1} parent=1 // pred_check_branch
      %100 = sbr.rel (0) target = $region25
    $region24: #{tpu_custom_call.1} parent=1 // pred_region
      %102 = vsyncadd [#allocation15], 0
      %s104 = sshll.u32 %s6, 4
      %s105 = int_to_ptr.hbm [resolvable:$true] %s104
      %s106 = sshll.u32 [#allocation14], 4
      %s107 = int_to_ptr.vmem [resolvable:$true] %s106
      %109 = dma.hbm_to_vmem [thread:$0]  %s105, 16, %s107, [#allocation15]
    $region25: #{tpu_custom_call.1} parent=1 // pred_fallthru
      _
    // Predicated region
    $region26: #{tpu_custom_call.1} parent=1 // pred_check
      _
    $region27: #{tpu_custom_call.1} parent=1 // pred_check_branch
      %111 = sbr.rel (0) target = $region29
    $region28: #{tpu_custom_call.1} parent=1 // pred_region
      %113 = vsyncadd [#allocation15], 0
      %s114 = sshll.u32 %s7, 4
      %s115 = int_to_ptr.hbm [resolvable:$true] %s114
      %s116 = sshll.u32 [#allocation16], 4
      %s117 = int_to_ptr.vmem [resolvable:$true] %s116
      %122 = dma.hbm_to_vmem [thread:$0]  %s115, 8192, %s117, [#allocation15], 512, 512, 32
    $region29: #{tpu_custom_call.1} parent=1 // pred_fallthru
      _
    // Predicated region
    $region30: #{tpu_custom_call.1} parent=1 // pred_check
      _
    $region31: #{tpu_custom_call.1} parent=1 // pred_check_branch
      %124 = sbr.rel (0) target = $region33
    $region32: #{tpu_custom_call.1} parent=1 // pred_region
      _
    $region33: #{tpu_custom_call.1} parent=1 // pred_fallthru
      _
    // Predicated region
    $region34: #{tpu_custom_call.1} parent=1 // pred_check
      _
    $region35: #{tpu_custom_call.1} parent=1 // pred_check_branch
      %126 = sbr.rel (0) target = $region37
    $region36: #{tpu_custom_call.1} parent=1 // pred_region
      %128 = vsyncadd [#allocation18], 0
      %s129 = sshll.u32 %s9, 4
      %s130 = int_to_ptr.hbm [resolvable:$true] %s129
      %s131 = sshll.u32 [#allocation17], 4
      %s132 = int_to_ptr.vmem [resolvable:$true] %s131
      %137 = dma.hbm_to_vmem [thread:$0]  %s130, 2048, %s132, [#allocation18], 128, 128, 8
    $region37: #{tpu_custom_call.1} parent=1 // pred_fallthru
      _
    // Predicated region
    $region38: #{tpu_custom_call.1} parent=1 // pred_check
      _
    $region39: #{tpu_custom_call.1} parent=1 // pred_check_branch
      %139 = sbr.rel (0) target = $region41
    $region40: #{tpu_custom_call.1} parent=1 // pred_region
      _
    $region41: #{tpu_custom_call.1} parent=1 // pred_fallthru
      _
    // Predicated region
    $region42: #{tpu_custom_call.1} parent=1 // pred_check
      _
    $region43: #{tpu_custom_call.1} parent=1 // pred_check_branch
      %141 = sbr.rel (0) target = $region45
    $region44: #{tpu_custom_call.1} parent=1 // pred_region
      %143 = vsyncadd [#allocation18], 0
      %s145 = sshll.u32 %s11, 4
      %s146 = int_to_ptr.hbm [resolvable:$true] %s145
      %s147 = sshll.u32 [#allocation19], 4
      %s148 = int_to_ptr.vmem [resolvable:$true] %s147
      %150 = dma.hbm_to_vmem [thread:$0]  %s146, 384, %s148, [#allocation18]
    $region45: #{tpu_custom_call.1} parent=1 // pred_fallthru
      _
    // Predicated region
    $region46: #{tpu_custom_call.1} parent=1 // pred_check
      _
    $region47: #{tpu_custom_call.1} parent=1 // pred_check_branch
      %152 = sbr.rel (0) target = $region49
    $region48: #{tpu_custom_call.1} parent=1 // pred_region
      _
    $region49: #{tpu_custom_call.1} parent=1 // pred_fallthru
      _
    // Predicated region
    $region50: #{tpu_custom_call.1} parent=1 // pred_check
      _
    $region51: #{tpu_custom_call.1} parent=1 // pred_check_branch
      %154 = sbr.rel (0) target = $region53
    $region52: #{tpu_custom_call.1} parent=1 // pred_region
      %156 = vsyncadd [#allocation21], 0
      %s157 = sshll.u32 %s13, 4
      %s158 = int_to_ptr.hbm [resolvable:$true] %s157
      %s159 = sshll.u32 [#allocation20], 4
      %s160 = int_to_ptr.vmem [resolvable:$true] %s159
      %165 = dma.hbm_to_vmem [thread:$0]  %s158, 384, %s160, [#allocation21], 128, 128, 8
    $region53: #{tpu_custom_call.1} parent=1 // pred_fallthru
      _
    // Predicated region
    $region54: #{tpu_custom_call.1} parent=1 // pred_check
      _
    $region55: #{tpu_custom_call.1} parent=1 // pred_check_branch
      %167 = sbr.rel (0) target = $region57
    $region56: #{tpu_custom_call.1} parent=1 // pred_region
      %169 = vsyncadd [#allocation21], 0
      %s170 = sshll.u32 %s14, 4
      %s171 = int_to_ptr.hbm [resolvable:$true] %s170
      %s172 = sshll.u32 [#allocation22], 4
      %s173 = int_to_ptr.vmem [resolvable:$true] %s172
      %178 = dma.hbm_to_vmem [thread:$0]  %s171, 384, %s173, [#allocation21], 128, 128, 8
    $region57: #{tpu_custom_call.1} parent=1 // pred_fallthru
      _
    // Predicated region
    $region58: #{tpu_custom_call.1} parent=1 // pred_check
      _
    $region59: #{tpu_custom_call.1} parent=1 // pred_check_branch
      %180 = sbr.rel (0) target = $region61
    $region60: #{tpu_custom_call.1} parent=1 // pred_region
      %182 = vsyncadd [#allocation24], 0
      %s183 = sshll.u32 %s15, 4
      %s184 = int_to_ptr.hbm [resolvable:$true] %s183
      %s185 = sshll.u32 [#allocation23], 4
      %s186 = int_to_ptr.vmem [resolvable:$true] %s185
      %191 = dma.hbm_to_vmem [thread:$0]  %s184, 384, %s186, [#allocation24], 128, 128, 8
    $region61: #{tpu_custom_call.1} parent=1 // pred_fallthru
      _
    // Predicated region
    $region62: #{tpu_custom_call.1} parent=1 // pred_check
      _
    $region63: #{tpu_custom_call.1} parent=1 // pred_check_branch
      %193 = sbr.rel (0) target = $region65
    $region64: #{tpu_custom_call.1} parent=1 // pred_region
      %195 = vsyncadd [#allocation24], 0
      %s196 = sshll.u32 %s16, 4
      %s197 = int_to_ptr.hbm [resolvable:$true] %s196
      %s198 = sshll.u32 [#allocation25], 4
      %s199 = int_to_ptr.vmem [resolvable:$true] %s198
      %204 = dma.hbm_to_vmem [thread:$0]  %s197, 384, %s199, [#allocation24], 128, 128, 8
    $region65: #{tpu_custom_call.1} parent=1 // pred_fallthru
      _
    // Predicated region
    $region66: #{tpu_custom_call.1} parent=1 // pred_check
      _
    $region67: #{tpu_custom_call.1} parent=1 // pred_check_branch
      %206 = sbr.rel (0) target = $region69
    $region68: #{tpu_custom_call.1} parent=1 // pred_region
      %208 = dma.done [#allocation6], 2048
    $region69: #{tpu_custom_call.1} parent=1 // pred_fallthru
      _
    // Predicated region
    $region70: #{tpu_custom_call.1} parent=1 // pred_check
      _
    $region71: #{tpu_custom_call.1} parent=1 // pred_check_branch
      %210 = sbr.rel (0) target = $region73
    $region72: #{tpu_custom_call.1} parent=1 // pred_region
      %212 = dma.done [#allocation9], 16
    $region73: #{tpu_custom_call.1} parent=1 // pred_fallthru
      _
    // Predicated region
    $region74: #{tpu_custom_call.1} parent=1 // pred_check
      _
    $region75: #{tpu_custom_call.1} parent=1 // pred_check_branch
      %214 = sbr.rel (0) target = $region77
    $region76: #{tpu_custom_call.1} parent=1 // pred_region
      %216 = dma.done [#allocation9], 2048
    $region77: #{tpu_custom_call.1} parent=1 // pred_fallthru
      _
    // Predicated region
    $region78: #{tpu_custom_call.1} parent=1 // pred_check
      _
    $region79: #{tpu_custom_call.1} parent=1 // pred_check_branch
      %218 = sbr.rel (0) target = $region81
    $region80: #{tpu_custom_call.1} parent=1 // pred_region
      %220 = dma.done [#allocation12], 16
    $region81: #{tpu_custom_call.1} parent=1 // pred_fallthru
      _
    // Predicated region
    $region82: #{tpu_custom_call.1} parent=1 // pred_check
      _
    $region83: #{tpu_custom_call.1} parent=1 // pred_check_branch
      %222 = sbr.rel (0) target = $region85
    $region84: #{tpu_custom_call.1} parent=1 // pred_region
      %224 = dma.done [#allocation12], 2048
    $region85: #{tpu_custom_call.1} parent=1 // pred_fallthru
      _
    // Predicated region
    $region86: #{tpu_custom_call.1} parent=1 // pred_check
      _
    $region87: #{tpu_custom_call.1} parent=1 // pred_check_branch
      %226 = sbr.rel (0) target = $region89
    $region88: #{tpu_custom_call.1} parent=1 // pred_region
      %228 = dma.done [#allocation15], 16
    $region89: #{tpu_custom_call.1} parent=1 // pred_fallthru
      _
    // Predicated region
    $region90: #{tpu_custom_call.1} parent=1 // pred_check
      _
    $region91: #{tpu_custom_call.1} parent=1 // pred_check_branch
      %230 = sbr.rel (0) target = $region93
    $region92: #{tpu_custom_call.1} parent=1 // pred_region
      %232 = dma.done [#allocation15], 8192
    $region93: #{tpu_custom_call.1} parent=1 // pred_fallthru
      _
    // Predicated region
    $region94: #{tpu_custom_call.1} parent=1 // pred_check
      _
    $region95: #{tpu_custom_call.1} parent=1 // pred_check_branch
      %234 = sbr.rel (0) target = $region97
    $region96: #{tpu_custom_call.1} parent=1 // pred_region
      %236 = dma.done [#allocation18], 2048
    $region97: #{tpu_custom_call.1} parent=1 // pred_fallthru
      _
    // Predicated region
    $region98: #{tpu_custom_call.1} parent=1 // pred_check
      _
    $region99: #{tpu_custom_call.1} parent=1 // pred_check_branch
      %238 = sbr.rel (0) target = $region101
    $region100: #{tpu_custom_call.1} parent=1 // pred_region
      %240 = dma.done [#allocation18], 384
    $region101: #{tpu_custom_call.1} parent=1 // pred_fallthru
      _
    // Predicated region
    $region102: #{tpu_custom_call.1} parent=1 // pred_check
      _
    $region103: #{tpu_custom_call.1} parent=1 // pred_check_branch
      %242 = sbr.rel (0) target = $region105
    $region104: #{tpu_custom_call.1} parent=1 // pred_region
      %244 = dma.done [#allocation21], 384
    $region105: #{tpu_custom_call.1} parent=1 // pred_fallthru
      _
    // Predicated region
    $region106: #{tpu_custom_call.1} parent=1 // pred_check
      _
    $region107: #{tpu_custom_call.1} parent=1 // pred_check_branch
      %246 = sbr.rel (0) target = $region109
    $region108: #{tpu_custom_call.1} parent=1 // pred_region
      %248 = dma.done [#allocation21], 384
    $region109: #{tpu_custom_call.1} parent=1 // pred_fallthru
      _
    // Predicated region
    $region110: #{tpu_custom_call.1} parent=1 // pred_check
      _
    $region111: #{tpu_custom_call.1} parent=1 // pred_check_branch
      %250 = sbr.rel (0) target = $region113
    $region112: #{tpu_custom_call.1} parent=1 // pred_region
      %252 = dma.done [#allocation24], 384
    $region113: #{tpu_custom_call.1} parent=1 // pred_fallthru
      _
    // Predicated region
    $region114: #{tpu_custom_call.1} parent=1 // pred_check
      _
    $region115: #{tpu_custom_call.1} parent=1 // pred_check_branch
      %254 = sbr.rel (0) target = $region117
    $region116: #{tpu_custom_call.1} parent=1 // pred_region
      %256 = dma.done [#allocation24], 384
    $region117: #{tpu_custom_call.1} parent=1 // pred_fallthru
      _
    %p257 = scmp.eq.s32.totalorder 0, 0
    // Predicated region
    $region118: #{tpu_custom_call.1} parent=1 // pred_check
      %p258 = pneg %p257
    $region119: #{tpu_custom_call.1} parent=1 // pred_check_branch
      %260 = sbr.rel (%p258) target = $region121
    $region120: #{tpu_custom_call.1} parent=1 // pred_region
      %261 = vst [vmem:[#allocation2] sm:$0xff] 0.0
      %262 = vst [vmem:[#allocation26] sm:$0xff] 0.0
      %263 = vst [vmem:[#allocation26 + $0x8] sm:$0xff] 0.0
      %264 = vst [vmem:[#allocation26 + $0x10] sm:$0xff] 0.0
      %265 = vst [vmem:[#allocation26 + $0x18] sm:$0xff] 0.0
    $region121: #{tpu_custom_call.1} parent=1 // pred_fallthru
      _
    %v266 = vld [vmem:[#allocation8] sm:$0x1]
    %v267 = vld [vmem:[#allocation11] sm:$0x1]
    %v268 = vld [vmem:[#allocation14] sm:$0x1]
    %v269 = vld [vmem:[%s8] sm:$0xf]
    %v270 = vld [vmem:[%s10] sm:$0x1]
    %v271 = vld [vmem:[%s12] sm:$0x7]
    %v272 = vld [vmem:[#allocation2] sm:$0xff]
    %s273 = smul.u32 0, 3
    %v274 = vld [vmem:[#allocation20] sm:$0xff]
    %v275 = vld [vmem:[#allocation22] sm:$0xff]
    %v276 = vld [vmem:[#allocation25] sm:$0xff]
    %v277 = vld [vmem:[#allocation23] sm:$0xff]
    %v278 = vld [vmem:[#allocation19] sm:$0xff]
    %v279 = vld [vmem:[#allocation19 + $0x8] sm:$0xff]
    %v280 = vld [vmem:[#allocation19 + $0x10] sm:$0xff]
    %v282 = vperm.slane %v271, 0
    %v283 = vperm.slane %v271, 1
    %v284 = vperm.slane %v271, 2
    %vm288 = vcmask 64512
    %v290 = vsel %vm288, %v277, 0
    %292 = vmatpush.msra.mxu0 0.0
    %293 = vmatpush.msra.mxu0 0.0
    %294 = vmatpush.msra.mxu0 0.0
    %295 = vmatpush.msra.mxu0 0.0
    %296 = vmatpush.msra.mxu0 0.0
    %297 = vmatpush.msra.mxu0 0.0
    %298 = vmatpush.msra.mxu0 0.0
    %299 = vmatpush.msra.mxu0 0.0
    %300 = vmatpush.msra.mxu0 0.0
    %301 = vmatpush.msra.mxu0 0.0
    %302 = vmatpush.msra.mxu0 0.0
    %303 = vmatpush.msra.mxu0 0.0
    %304 = vmatpush.msra.mxu0 0.0
    %305 = vmatpush.msra.mxu0 0.0
    %306 = vmatpush.msra.mxu0 0.0
    %307 = vmatpush.msra.mxu0 %v278
    %308 = vmatmul.f32.gmra.mxu0 %v290
    %v309 = vpop.f32.mrf.mxu0
    %v310 = vadd.f32 %v282, %v309
    %311 = vdwg.mxu0
    %312 = vmatpush.msra.mxu0 0.0
    %313 = vmatpush.msra.mxu0 0.0
    %314 = vmatpush.msra.mxu0 0.0
    %315 = vmatpush.msra.mxu0 0.0
    %316 = vmatpush.msra.mxu0 0.0
    %317 = vmatpush.msra.mxu0 0.0
    %318 = vmatpush.msra.mxu0 0.0
    %319 = vmatpush.msra.mxu0 0.0
    %320 = vmatpush.msra.mxu0 0.0
    %321 = vmatpush.msra.mxu0 0.0
    %322 = vmatpush.msra.mxu0 0.0
    %323 = vmatpush.msra.mxu0 0.0
    %324 = vmatpush.msra.mxu0 0.0
    %325 = vmatpush.msra.mxu0 0.0
    %326 = vmatpush.msra.mxu0 0.0
    %327 = vmatpush.msra.mxu0 %v279
    %328 = vmatmul.f32.gmra.mxu0 %v290
    %v329 = vpop.f32.mrf.mxu0
    %v330 = vadd.f32 %v283, %v329
    %331 = vdwg.mxu0
    %332 = vmatpush.msra.mxu0 0.0
    %333 = vmatpush.msra.mxu0 0.0
    %334 = vmatpush.msra.mxu0 0.0
    %335 = vmatpush.msra.mxu0 0.0
    %336 = vmatpush.msra.mxu0 0.0
    %337 = vmatpush.msra.mxu0 0.0
    %338 = vmatpush.msra.mxu0 0.0
    %339 = vmatpush.msra.mxu0 0.0
    %340 = vmatpush.msra.mxu0 0.0
    %341 = vmatpush.msra.mxu0 0.0
    %342 = vmatpush.msra.mxu0 0.0
    %343 = vmatpush.msra.mxu0 0.0
    %344 = vmatpush.msra.mxu0 0.0
    %345 = vmatpush.msra.mxu0 0.0
    %346 = vmatpush.msra.mxu0 0.0
    %347 = vmatpush.msra.mxu0 %v280
    %348 = vmatmul.f32.gmra.mxu0 %v290
    %v349 = vpop.f32.mrf.mxu0
    %v350 = vadd.f32 %v284, %v349
    %351 = vdwg.mxu0
    %s352 = sld [smem:[#allocation4 + %s273]]
    // While loop
    $region122: #{tpu_custom_call.1} parent=1 // loop_pre_header
      _
    $region123: #{tpu_custom_call.1} parent=1 // loop_header
      %s354 = sphi 0, %s356
      %p355 = scmp.ge.s32.totalorder %s354, %s352
      %v359 = vphi %v272, %v480
    $region124: #{tpu_custom_call.1} parent=1 // loop_header_branch
      %358 = sbr.rel (%p355) target = $region128
    $region125: #{tpu_custom_call.1} parent=1 // loop_body
      %v360 = vld [vmem:[#allocation5] sm:$0xff]
      %v361 = vld [vmem:[#allocation5 + $0x8] sm:$0xff]
      %v362 = vld [vmem:[#allocation5 + $0x10] sm:$0xff]
      %v363 = vld [vmem:[#allocation5 + $0x18] sm:$0xff]
      %v364 = vld [vmem:[#allocation5 + $0x20] sm:$0xff]
      %v365 = vld [vmem:[#allocation5 + $0x28] sm:$0xff]
      %v366 = vld [vmem:[#allocation5 + $0x30] sm:$0xff]
      %v367 = vld [vmem:[#allocation5 + $0x38] sm:$0xff]
      %v368 = vld [vmem:[#allocation5 + $0x40] sm:$0xff]
      %v369 = vld [vmem:[#allocation5 + $0x48] sm:$0xff]
      %v370 = vld [vmem:[#allocation5 + $0x50] sm:$0xff]
      %v371 = vld [vmem:[#allocation5 + $0x58] sm:$0xff]
      %v372 = vld [vmem:[#allocation5 + $0x60] sm:$0xff]
      %v373 = vld [vmem:[#allocation5 + $0x68] sm:$0xff]
      %v374 = vld [vmem:[#allocation5 + $0x70] sm:$0xff]
      %v375 = vld [vmem:[#allocation5 + $0x78] sm:$0xff]
      %v377 = vperm.slane %v266, 0
      %379 = vmatpush.msra.mxu0 %v375
      %380 = vmatpush.msra.mxu0 %v374
      %381 = vmatpush.msra.mxu0 %v373
      %382 = vmatpush.msra.mxu0 %v372
      %383 = vmatpush.msra.mxu0 %v371
      %384 = vmatpush.msra.mxu0 %v370
      %385 = vmatpush.msra.mxu0 %v369
      %386 = vmatpush.msra.mxu0 %v368
      %387 = vmatpush.msra.mxu0 %v367
      %388 = vmatpush.msra.mxu0 %v366
      %389 = vmatpush.msra.mxu0 %v365
      %390 = vmatpush.msra.mxu0 %v364
      %391 = vmatpush.msra.mxu0 %v363
      %392 = vmatpush.msra.mxu0 %v362
      %393 = vmatpush.msra.mxu0 %v361
      %394 = vmatpush.msra.mxu0 %v360
      %395 = vmatmul.f32.gmra.mxu0 %v359
      %v396 = vpop.f32.mrf.mxu0
      %v397 = vadd.f32 %v377, %v396
      %398 = vdwg.mxu0
      %v399 = vtanh.pop %v397
      %v400 = vld [vmem:[#allocation10] sm:$0xff]
      %v401 = vld [vmem:[#allocation10 + $0x8] sm:$0xff]
      %v402 = vld [vmem:[#allocation10 + $0x10] sm:$0xff]
      %v403 = vld [vmem:[#allocation10 + $0x18] sm:$0xff]
      %v404 = vld [vmem:[#allocation10 + $0x20] sm:$0xff]
      %v405 = vld [vmem:[#allocation10 + $0x28] sm:$0xff]
      %v406 = vld [vmem:[#allocation10 + $0x30] sm:$0xff]
      %v407 = vld [vmem:[#allocation10 + $0x38] sm:$0xff]
      %v408 = vld [vmem:[#allocation10 + $0x40] sm:$0xff]
      %v409 = vld [vmem:[#allocation10 + $0x48] sm:$0xff]
      %v410 = vld [vmem:[#allocation10 + $0x50] sm:$0xff]
      %v411 = vld [vmem:[#allocation10 + $0x58] sm:$0xff]
      %v412 = vld [vmem:[#allocation10 + $0x60] sm:$0xff]
      %v413 = vld [vmem:[#allocation10 + $0x68] sm:$0xff]
      %v414 = vld [vmem:[#allocation10 + $0x70] sm:$0xff]
      %v415 = vld [vmem:[#allocation10 + $0x78] sm:$0xff]
      %v417 = vperm.slane %v267, 0
      %419 = vmatpush.msra.mxu0 %v415
      %420 = vmatpush.msra.mxu0 %v414
      %421 = vmatpush.msra.mxu0 %v413
      %422 = vmatpush.msra.mxu0 %v412
      %423 = vmatpush.msra.mxu0 %v411
      %424 = vmatpush.msra.mxu0 %v410
      %425 = vmatpush.msra.mxu0 %v409
      %426 = vmatpush.msra.mxu0 %v408
      %427 = vmatpush.msra.mxu0 %v407
      %428 = vmatpush.msra.mxu0 %v406
      %429 = vmatpush.msra.mxu0 %v405
      %430 = vmatpush.msra.mxu0 %v404
      %431 = vmatpush.msra.mxu0 %v403
      %432 = vmatpush.msra.mxu0 %v402
      %433 = vmatpush.msra.mxu0 %v401
      %434 = vmatpush.msra.mxu0 %v400
      %435 = vmatmul.f32.gmra.mxu0 %v399
      %v436 = vpop.f32.mrf.mxu0
      %v437 = vadd.f32 %v417, %v436
      %438 = vdwg.mxu0
      %v439 = vtanh.pop %v437
      %v440 = vld [vmem:[#allocation13] sm:$0xff]
      %v441 = vld [vmem:[#allocation13 + $0x8] sm:$0xff]
      %v442 = vld [vmem:[#allocation13 + $0x10] sm:$0xff]
      %v443 = vld [vmem:[#allocation13 + $0x18] sm:$0xff]
      %v444 = vld [vmem:[#allocation13 + $0x20] sm:$0xff]
      %v445 = vld [vmem:[#allocation13 + $0x28] sm:$0xff]
      %v446 = vld [vmem:[#allocation13 + $0x30] sm:$0xff]
      %v447 = vld [vmem:[#allocation13 + $0x38] sm:$0xff]
      %v448 = vld [vmem:[#allocation13 + $0x40] sm:$0xff]
      %v449 = vld [vmem:[#allocation13 + $0x48] sm:$0xff]
      %v450 = vld [vmem:[#allocation13 + $0x50] sm:$0xff]
      %v451 = vld [vmem:[#allocation13 + $0x58] sm:$0xff]
      %v452 = vld [vmem:[#allocation13 + $0x60] sm:$0xff]
      %v453 = vld [vmem:[#allocation13 + $0x68] sm:$0xff]
      %v454 = vld [vmem:[#allocation13 + $0x70] sm:$0xff]
      %v455 = vld [vmem:[#allocation13 + $0x78] sm:$0xff]
      %v457 = vperm.slane %v268, 0
      %459 = vmatpush.msra.mxu0 %v455
      %460 = vmatpush.msra.mxu0 %v454
      %461 = vmatpush.msra.mxu0 %v453
      %462 = vmatpush.msra.mxu0 %v452
      %463 = vmatpush.msra.mxu0 %v451
      %464 = vmatpush.msra.mxu0 %v450
      %465 = vmatpush.msra.mxu0 %v449
      %466 = vmatpush.msra.mxu0 %v448
      %467 = vmatpush.msra.mxu0 %v447
      %468 = vmatpush.msra.mxu0 %v446
      %469 = vmatpush.msra.mxu0 %v445
      %470 = vmatpush.msra.mxu0 %v444
      %471 = vmatpush.msra.mxu0 %v443
      %472 = vmatpush.msra.mxu0 %v442
      %473 = vmatpush.msra.mxu0 %v441
      %474 = vmatpush.msra.mxu0 %v440
      %475 = vmatmul.f32.gmra.mxu0 %v439
      %v476 = vpop.f32.mrf.mxu0
      %v477 = vadd.f32 %v457, %v476
      %478 = vdwg.mxu0
      %v479 = vmul.f32 %v477, 0.5
      %v480 = vadd.f32 %v359, %v479
    $region126: #{tpu_custom_call.1} parent=1 // loop_footer
      %s356 = sadd.s32 %s354, 1
    $region127: #{tpu_custom_call.1} parent=1 // loop_footer_branch
      %353 = sbr.rel target = $region123
    $region128: #{tpu_custom_call.1} parent=1 // loop_exit
      _
    %v482 = vsel %vm288, %v276, 0
    %484 = vmatpush.msra.mxu0 0.0
    %485 = vmatpush.msra.mxu0 0.0
    %486 = vmatpush.msra.mxu0 0.0
    %487 = vmatpush.msra.mxu0 0.0
    %488 = vmatpush.msra.mxu0 0.0
    %489 = vmatpush.msra.mxu0 0.0
    %490 = vmatpush.msra.mxu0 0.0
    %491 = vmatpush.msra.mxu0 0.0
    %492 = vmatpush.msra.mxu0 0.0
    %493 = vmatpush.msra.mxu0 0.0
    %494 = vmatpush.msra.mxu0 0.0
    %495 = vmatpush.msra.mxu0 0.0
    %496 = vmatpush.msra.mxu0 0.0
    %497 = vmatpush.msra.mxu0 0.0
    %498 = vmatpush.msra.mxu0 0.0
    %499 = vmatpush.msra.mxu0 %v359
    %500 = vmatmul.f32.gmra.mxu0 %v482
    %v501 = vpop.f32.mrf.mxu0
    %v502 = vadd.f32 0.0, %v501
    %503 = vdwg.mxu0
    %v504 = vld [vmem:[#allocation16] sm:$0xff]
    %v505 = vld [vmem:[#allocation16 + $0x8] sm:$0xff]
    %v506 = vld [vmem:[#allocation16 + $0x10] sm:$0xff]
    %v507 = vld [vmem:[#allocation16 + $0x18] sm:$0xff]
    %v508 = vld [vmem:[#allocation16 + $0x20] sm:$0xff]
    %v509 = vld [vmem:[#allocation16 + $0x28] sm:$0xff]
    %v510 = vld [vmem:[#allocation16 + $0x30] sm:$0xff]
    %v511 = vld [vmem:[#allocation16 + $0x38] sm:$0xff]
    %v512 = vld [vmem:[#allocation16 + $0x40] sm:$0xff]
    %v513 = vld [vmem:[#allocation16 + $0x48] sm:$0xff]
    %v514 = vld [vmem:[#allocation16 + $0x50] sm:$0xff]
    %v515 = vld [vmem:[#allocation16 + $0x58] sm:$0xff]
    %v516 = vld [vmem:[#allocation16 + $0x60] sm:$0xff]
    %v517 = vld [vmem:[#allocation16 + $0x68] sm:$0xff]
    %v518 = vld [vmem:[#allocation16 + $0x70] sm:$0xff]
    %v519 = vld [vmem:[#allocation16 + $0x78] sm:$0xff]
    %v520 = vld [vmem:[#allocation16 + $0x80] sm:$0xff]
    %v521 = vld [vmem:[#allocation16 + $0x88] sm:$0xff]
    %v522 = vld [vmem:[#allocation16 + $0x90] sm:$0xff]
    %v523 = vld [vmem:[#allocation16 + $0x98] sm:$0xff]
    %v524 = vld [vmem:[#allocation16 + $0xa0] sm:$0xff]
    %v525 = vld [vmem:[#allocation16 + $0xa8] sm:$0xff]
    %v526 = vld [vmem:[#allocation16 + $0xb0] sm:$0xff]
    %v527 = vld [vmem:[#allocation16 + $0xb8] sm:$0xff]
    %v528 = vld [vmem:[#allocation16 + $0xc0] sm:$0xff]
    %v529 = vld [vmem:[#allocation16 + $0xc8] sm:$0xff]
    %v530 = vld [vmem:[#allocation16 + $0xd0] sm:$0xff]
    %v531 = vld [vmem:[#allocation16 + $0xd8] sm:$0xff]
    %v532 = vld [vmem:[#allocation16 + $0xe0] sm:$0xff]
    %v533 = vld [vmem:[#allocation16 + $0xe8] sm:$0xff]
    %v534 = vld [vmem:[#allocation16 + $0xf0] sm:$0xff]
    %v535 = vld [vmem:[#allocation16 + $0xf8] sm:$0xff]
    %v536 = vld [vmem:[#allocation16 + $0x100] sm:$0xff]
    %v537 = vld [vmem:[#allocation16 + $0x108] sm:$0xff]
    %v538 = vld [vmem:[#allocation16 + $0x110] sm:$0xff]
    %v539 = vld [vmem:[#allocation16 + $0x118] sm:$0xff]
    %v540 = vld [vmem:[#allocation16 + $0x120] sm:$0xff]
    %v541 = vld [vmem:[#allocation16 + $0x128] sm:$0xff]
    %v542 = vld [vmem:[#allocation16 + $0x130] sm:$0xff]
    %v543 = vld [vmem:[#allocation16 + $0x138] sm:$0xff]
    %v544 = vld [vmem:[#allocation16 + $0x140] sm:$0xff]
    %v545 = vld [vmem:[#allocation16 + $0x148] sm:$0xff]
    %v546 = vld [vmem:[#allocation16 + $0x150] sm:$0xff]
    %v547 = vld [vmem:[#allocation16 + $0x158] sm:$0xff]
    %v548 = vld [vmem:[#allocation16 + $0x160] sm:$0xff]
    %v549 = vld [vmem:[#allocation16 + $0x168] sm:$0xff]
    %v550 = vld [vmem:[#allocation16 + $0x170] sm:$0xff]
    %v551 = vld [vmem:[#allocation16 + $0x178] sm:$0xff]
    %v552 = vld [vmem:[#allocation16 + $0x180] sm:$0xff]
    %v553 = vld [vmem:[#allocation16 + $0x188] sm:$0xff]
    %v554 = vld [vmem:[#allocation16 + $0x190] sm:$0xff]
    %v555 = vld [vmem:[#allocation16 + $0x198] sm:$0xff]
    %v556 = vld [vmem:[#allocation16 + $0x1a0] sm:$0xff]
    %v557 = vld [vmem:[#allocation16 + $0x1a8] sm:$0xff]
    %v558 = vld [vmem:[#allocation16 + $0x1b0] sm:$0xff]
    %v559 = vld [vmem:[#allocation16 + $0x1b8] sm:$0xff]
    %v560 = vld [vmem:[#allocation16 + $0x1c0] sm:$0xff]
    %v561 = vld [vmem:[#allocation16 + $0x1c8] sm:$0xff]
    %v562 = vld [vmem:[#allocation16 + $0x1d0] sm:$0xff]
    %v563 = vld [vmem:[#allocation16 + $0x1d8] sm:$0xff]
    %v564 = vld [vmem:[#allocation16 + $0x1e0] sm:$0xff]
    %v565 = vld [vmem:[#allocation16 + $0x1e8] sm:$0xff]
    %v566 = vld [vmem:[#allocation16 + $0x1f0] sm:$0xff]
    %v567 = vld [vmem:[#allocation16 + $0x1f8] sm:$0xff]
    %v569 = vperm.slane %v269, 0
    %v570 = vperm.slane %v269, 1
    %v571 = vperm.slane %v269, 2
    %v572 = vperm.slane %v269, 3
    %577 = vmatpush.msra.mxu0 %v564
    %578 = vmatpush.msra.mxu0 %v560
    %579 = vmatpush.msra.mxu0 %v556
    %580 = vmatpush.msra.mxu0 %v552
    %581 = vmatpush.msra.mxu0 %v548
    %582 = vmatpush.msra.mxu0 %v544
    %583 = vmatpush.msra.mxu0 %v540
    %584 = vmatpush.msra.mxu0 %v536
    %585 = vmatpush.msra.mxu0 %v532
    %586 = vmatpush.msra.mxu0 %v528
    %587 = vmatpush.msra.mxu0 %v524
    %588 = vmatpush.msra.mxu0 %v520
    %589 = vmatpush.msra.mxu0 %v516
    %590 = vmatpush.msra.mxu0 %v512
    %591 = vmatpush.msra.mxu0 %v508
    %592 = vmatpush.msra.mxu0 %v504
    %593 = vmatmul.f32.gmra.mxu0 %v502
    %v594 = vpop.f32.mrf.mxu0
    %v595 = vadd.f32 %v569, %v594
    %596 = vdwg.mxu0
    %597 = vmatpush.msra.mxu0 %v565
    %598 = vmatpush.msra.mxu0 %v561
    %599 = vmatpush.msra.mxu0 %v557
    %600 = vmatpush.msra.mxu0 %v553
    %601 = vmatpush.msra.mxu0 %v549
    %602 = vmatpush.msra.mxu0 %v545
    %603 = vmatpush.msra.mxu0 %v541
    %604 = vmatpush.msra.mxu0 %v537
    %605 = vmatpush.msra.mxu0 %v533
    %606 = vmatpush.msra.mxu0 %v529
    %607 = vmatpush.msra.mxu0 %v525
    %608 = vmatpush.msra.mxu0 %v521
    %609 = vmatpush.msra.mxu0 %v517
    %610 = vmatpush.msra.mxu0 %v513
    %611 = vmatpush.msra.mxu0 %v509
    %612 = vmatpush.msra.mxu0 %v505
    %613 = vmatmul.f32.gmra.mxu0 %v502
    %v614 = vpop.f32.mrf.mxu0
    %v615 = vadd.f32 %v570, %v614
    %616 = vdwg.mxu0
    %617 = vmatpush.msra.mxu0 %v566
    %618 = vmatpush.msra.mxu0 %v562
    %619 = vmatpush.msra.mxu0 %v558
    %620 = vmatpush.msra.mxu0 %v554
    %621 = vmatpush.msra.mxu0 %v550
    %622 = vmatpush.msra.mxu0 %v546
    %623 = vmatpush.msra.mxu0 %v542
    %624 = vmatpush.msra.mxu0 %v538
    %625 = vmatpush.msra.mxu0 %v534
    %626 = vmatpush.msra.mxu0 %v530
    %627 = vmatpush.msra.mxu0 %v526
    %628 = vmatpush.msra.mxu0 %v522
    %629 = vmatpush.msra.mxu0 %v518
    %630 = vmatpush.msra.mxu0 %v514
    %631 = vmatpush.msra.mxu0 %v510
    %632 = vmatpush.msra.mxu0 %v506
    %633 = vmatmul.f32.gmra.mxu0 %v502
    %v634 = vpop.f32.mrf.mxu0
    %v635 = vadd.f32 %v571, %v634
    %636 = vdwg.mxu0
    %637 = vmatpush.msra.mxu0 %v567
    %638 = vmatpush.msra.mxu0 %v563
    %639 = vmatpush.msra.mxu0 %v559
    %640 = vmatpush.msra.mxu0 %v555
    %641 = vmatpush.msra.mxu0 %v551
    %642 = vmatpush.msra.mxu0 %v547
    %643 = vmatpush.msra.mxu0 %v543
    %644 = vmatpush.msra.mxu0 %v539
    %645 = vmatpush.msra.mxu0 %v535
    %646 = vmatpush.msra.mxu0 %v531
    %647 = vmatpush.msra.mxu0 %v527
    %648 = vmatpush.msra.mxu0 %v523
    %649 = vmatpush.msra.mxu0 %v519
    %650 = vmatpush.msra.mxu0 %v515
    %651 = vmatpush.msra.mxu0 %v511
    %652 = vmatpush.msra.mxu0 %v507
    %653 = vmatmul.f32.gmra.mxu0 %v502
    %v654 = vpop.f32.mrf.mxu0
    %v655 = vadd.f32 %v572, %v654
    %656 = vdwg.mxu0
    %v657 = vmax.f32 %v595, 0.0
    %v658 = vld [vmem:[#allocation17] sm:$0xff]
    %v659 = vld [vmem:[#allocation17 + $0x8] sm:$0xff]
    %v660 = vld [vmem:[#allocation17 + $0x10] sm:$0xff]
    %v661 = vld [vmem:[#allocation17 + $0x18] sm:$0xff]
    %v662 = vld [vmem:[#allocation17 + $0x20] sm:$0xff]
    %v663 = vld [vmem:[#allocation17 + $0x28] sm:$0xff]
    %v664 = vld [vmem:[#allocation17 + $0x30] sm:$0xff]
    %v665 = vld [vmem:[#allocation17 + $0x38] sm:$0xff]
    %v666 = vld [vmem:[#allocation17 + $0x40] sm:$0xff]
    %v667 = vld [vmem:[#allocation17 + $0x48] sm:$0xff]
    %v668 = vld [vmem:[#allocation17 + $0x50] sm:$0xff]
    %v669 = vld [vmem:[#allocation17 + $0x58] sm:$0xff]
    %v670 = vld [vmem:[#allocation17 + $0x60] sm:$0xff]
    %v671 = vld [vmem:[#allocation17 + $0x68] sm:$0xff]
    %v672 = vld [vmem:[#allocation17 + $0x70] sm:$0xff]
    %v673 = vld [vmem:[#allocation17 + $0x78] sm:$0xff]
    %v675 = vperm.slane %v270, 0
    %677 = vmatpush.msra.mxu0 %v673
    %678 = vmatpush.msra.mxu0 %v672
    %679 = vmatpush.msra.mxu0 %v671
    %680 = vmatpush.msra.mxu0 %v670
    %681 = vmatpush.msra.mxu0 %v669
    %682 = vmatpush.msra.mxu0 %v668
    %683 = vmatpush.msra.mxu0 %v667
    %684 = vmatpush.msra.mxu0 %v666
    %685 = vmatpush.msra.mxu0 %v665
    %686 = vmatpush.msra.mxu0 %v664
    %687 = vmatpush.msra.mxu0 %v663
    %688 = vmatpush.msra.mxu0 %v662
    %689 = vmatpush.msra.mxu0 %v661
    %690 = vmatpush.msra.mxu0 %v660
    %691 = vmatpush.msra.mxu0 %v659
    %692 = vmatpush.msra.mxu0 %v658
    %693 = vmatmul.f32.gmra.mxu0 %v657
    %v694 = vpop.f32.mrf.mxu0
    %v695 = vadd.f32 %v675, %v694
    %696 = vdwg.mxu0
    %v697 = vsub.f32 %v274, %v695
    %v698 = vmul.f32 %v697, %v697
    %v699 = vmul.f32 %v698, %v275
    %v700 = vadd.f32 %v699, 0.0
    %v701 = vand.u32 2147483647, %v697
    %v702 = vmul.f32 %v701, %v275
    %v703 = vadd.f32 %v702, 0.0
    %v704 = vadd.f32 %v274, 1e-08
    %v705 = vrcp.pop %v704
    %v706 = vmul.f32 %v704, %v705
    %v707 = vsub.f32 1.0, %v706
    %v708 = vmul.f32 %v705, %v707
    %v709 = vadd.f32 %v705, %v708
    %vm710 = vweird.f32 %v704
    %vm711 = vweird.f32 %v705
    %vm712 = vmor %vm710, %vm711
    %v713 = vsel %vm712, %v705, %v709
    %v714 = vand.u32 2147483647, %v704
    %vm715 = vcmp.eq.f32.partialorder %v714, 8.507059e+37
    %v716 = vand.u32 %v704, 2147483648
    %v717 = vor.u32 1.1754944e-38, %v716
    %v718 = vsel %vm715, %v717, %v713
    %v719 = vmul.f32 %v701, %v718
    %v720 = vmul.f32 %v719, %v275
    %v721 = vadd.f32 %v720, 0.0
    %v722 = vadd.f32 %v275, 0.0
    %v723 = vadd.f32 %v310, %v615
    %v724 = vxor.u32 %v723, 2147483648
    %v725 = vmul.f32 %v724, 1.442695
    %v726 = vpow.pop %v725
    %v727 = vadd.f32 %v726, 1.0
    %v728 = vrcp.pop %v727
    %v729 = vmul.f32 %v727, %v728
    %v730 = vsub.f32 1.0, %v729
    %v731 = vmul.f32 %v728, %v730
    %v732 = vadd.f32 %v728, %v731
    %vm733 = vweird.f32 %v727
    %vm734 = vweird.f32 %v728
    %vm735 = vmor %vm733, %vm734
    %v736 = vsel %vm735, %v728, %v732
    %v737 = vand.u32 2147483647, %v727
    %vm738 = vcmp.eq.f32.partialorder %v737, 8.507059e+37
    %v739 = vand.u32 %v727, 2147483648
    %v740 = vor.u32 1.1754944e-38, %v739
    %v741 = vsel %vm738, %v740, %v736
    %v742 = vmul.f32 1.0, %v741
    %v743 = vadd.f32 %v330, %v635
    %v744 = vxor.u32 %v743, 2147483648
    %v745 = vmul.f32 %v744, 1.442695
    %v746 = vpow.pop %v745
    %v747 = vadd.f32 %v746, 1.0
    %v748 = vrcp.pop %v747
    %v749 = vmul.f32 %v747, %v748
    %v750 = vsub.f32 1.0, %v749
    %v751 = vmul.f32 %v748, %v750
    %v752 = vadd.f32 %v748, %v751
    %vm753 = vweird.f32 %v747
    %vm754 = vweird.f32 %v748
    %vm755 = vmor %vm753, %vm754
    %v756 = vsel %vm755, %v748, %v752
    %v757 = vand.u32 2147483647, %v747
    %vm758 = vcmp.eq.f32.partialorder %v757, 8.507059e+37
    %v759 = vand.u32 %v747, 2147483648
    %v760 = vor.u32 1.1754944e-38, %v759
    %v761 = vsel %vm758, %v760, %v756
    %v762 = vmul.f32 1.0, %v761
    %v763 = vmul.f32 %v742, %v655
    %v764 = vadd.f32 %v350, %v763
    %v765 = vtanh.pop %v764
    %v766 = vsub.f32 1.0, %v762
    %v767 = vmul.f32 %v766, %v765
    %v768 = vmul.f32 %v762, %v502
    %v769 = vadd.f32 %v767, %v768
    %v770 = vsub.f32 %v769, %v502
    %771 = vxpose.xlu0.b32.start [1/16] %v276, 128
    %772 = vxpose.xlu0.b32.cont [2/16] 0.0, 128
    %773 = vxpose.xlu0.b32.cont [3/16] 0.0, 128
    %774 = vxpose.xlu0.b32.cont [4/16] 0.0, 128
    %775 = vxpose.xlu0.b32.cont [5/16] 0.0, 128
    %776 = vxpose.xlu0.b32.cont [6/16] 0.0, 128
    %777 = vxpose.xlu0.b32.cont [7/16] 0.0, 128
    %778 = vxpose.xlu0.b32.cont [8/16] 0.0, 128
    %779 = vxpose.xlu0.b32.cont [9/16] 0.0, 128
    %780 = vxpose.xlu0.b32.cont [10/16] 0.0, 128
    %781 = vxpose.xlu0.b32.cont [11/16] 0.0, 128
    %782 = vxpose.xlu0.b32.cont [12/16] 0.0, 128
    %783 = vxpose.xlu0.b32.cont [13/16] 0.0, 128
    %784 = vxpose.xlu0.b32.cont [14/16] 0.0, 128
    %785 = vxpose.xlu0.b32.cont [15/16] 0.0, 128
    %786 = vxpose.xlu0.b32.end [16/16] 0.0, 128
    %v787 = vpop.trf.xlu0
    %v788 = vpop.trf.xlu0
    %v789 = vpop.trf.xlu0
    %v790 = vpop.trf.xlu0
    %v791 = vpop.trf.xlu0
    %v792 = vpop.trf.xlu0
    %v793 = vpop.trf.xlu0
    %v794 = vpop.trf.xlu0
    %v795 = vpop.trf.xlu0
    %v796 = vpop.trf.xlu0
    %v797 = vpop.trf.xlu0
    %v798 = vpop.trf.xlu0
    %v799 = vpop.trf.xlu0
    %v800 = vpop.trf.xlu0
    %v801 = vpop.trf.xlu0
    %v802 = vpop.trf.xlu0
    %v804 = vsel %vm288, %v787, 0
    %806 = vmatpush.msra.mxu0 0.0
    %807 = vmatpush.msra.mxu0 0.0
    %808 = vmatpush.msra.mxu0 0.0
    %809 = vmatpush.msra.mxu0 0.0
    %810 = vmatpush.msra.mxu0 0.0
    %811 = vmatpush.msra.mxu0 0.0
    %812 = vmatpush.msra.mxu0 0.0
    %813 = vmatpush.msra.mxu0 0.0
    %814 = vmatpush.msra.mxu0 0.0
    %815 = vmatpush.msra.mxu0 0.0
    %816 = vmatpush.msra.mxu0 0.0
    %817 = vmatpush.msra.mxu0 0.0
    %818 = vmatpush.msra.mxu0 0.0
    %819 = vmatpush.msra.mxu0 0.0
    %820 = vmatpush.msra.mxu0 0.0
    %821 = vmatpush.msra.mxu0 %v770
    %822 = vmatmul.f32.gmra.mxu0 %v804
    %v823 = vpop.f32.mrf.mxu0
    %v824 = vadd.f32 0.0, %v823
    %825 = vdwg.mxu0
    %v826 = vadd.f32 %v359, %v824
    %s827 = sadd.s32 %s273, 1
    %s828 = scalar_lea.vmem [#allocation20], 8
    %v829 = vld [vmem:[%s828] sm:$0xff]
    %s830 = scalar_lea.vmem [#allocation22], 8
    %v831 = vld [vmem:[%s830] sm:$0xff]
    %s832 = scalar_lea.vmem [#allocation25], 8
    %v833 = vld [vmem:[%s832] sm:$0xff]
    %s834 = scalar_lea.vmem [#allocation23], 8
    %v835 = vld [vmem:[%s834] sm:$0xff]
    %v837 = vsel %vm288, %v835, 0
    %839 = vmatpush.msra.mxu0 0.0
    %840 = vmatpush.msra.mxu0 0.0
    %841 = vmatpush.msra.mxu0 0.0
    %842 = vmatpush.msra.mxu0 0.0
    %843 = vmatpush.msra.mxu0 0.0
    %844 = vmatpush.msra.mxu0 0.0
    %845 = vmatpush.msra.mxu0 0.0
    %846 = vmatpush.msra.mxu0 0.0
    %847 = vmatpush.msra.mxu0 0.0
    %848 = vmatpush.msra.mxu0 0.0
    %849 = vmatpush.msra.mxu0 0.0
    %850 = vmatpush.msra.mxu0 0.0
    %851 = vmatpush.msra.mxu0 0.0
    %852 = vmatpush.msra.mxu0 0.0
    %853 = vmatpush.msra.mxu0 0.0
    %854 = vmatpush.msra.mxu0 %v278
    %855 = vmatmul.f32.gmra.mxu0 %v837
    %v856 = vpop.f32.mrf.mxu0
    %v857 = vadd.f32 %v282, %v856
    %858 = vdwg.mxu0
    %859 = vmatpush.msra.mxu0 0.0
    %860 = vmatpush.msra.mxu0 0.0
    %861 = vmatpush.msra.mxu0 0.0
    %862 = vmatpush.msra.mxu0 0.0
    %863 = vmatpush.msra.mxu0 0.0
    %864 = vmatpush.msra.mxu0 0.0
    %865 = vmatpush.msra.mxu0 0.0
    %866 = vmatpush.msra.mxu0 0.0
    %867 = vmatpush.msra.mxu0 0.0
    %868 = vmatpush.msra.mxu0 0.0
    %869 = vmatpush.msra.mxu0 0.0
    %870 = vmatpush.msra.mxu0 0.0
    %871 = vmatpush.msra.mxu0 0.0
    %872 = vmatpush.msra.mxu0 0.0
    %873 = vmatpush.msra.mxu0 0.0
    %874 = vmatpush.msra.mxu0 %v279
    %875 = vmatmul.f32.gmra.mxu0 %v837
    %v876 = vpop.f32.mrf.mxu0
    %v877 = vadd.f32 %v283, %v876
    %878 = vdwg.mxu0
    %879 = vmatpush.msra.mxu0 0.0
    %880 = vmatpush.msra.mxu0 0.0
    %881 = vmatpush.msra.mxu0 0.0
    %882 = vmatpush.msra.mxu0 0.0
    %883 = vmatpush.msra.mxu0 0.0
    %884 = vmatpush.msra.mxu0 0.0
    %885 = vmatpush.msra.mxu0 0.0
    %886 = vmatpush.msra.mxu0 0.0
    %887 = vmatpush.msra.mxu0 0.0
    %888 = vmatpush.msra.mxu0 0.0
    %889 = vmatpush.msra.mxu0 0.0
    %890 = vmatpush.msra.mxu0 0.0
    %891 = vmatpush.msra.mxu0 0.0
    %892 = vmatpush.msra.mxu0 0.0
    %893 = vmatpush.msra.mxu0 0.0
    %894 = vmatpush.msra.mxu0 %v280
    %895 = vmatmul.f32.gmra.mxu0 %v837
    %v896 = vpop.f32.mrf.mxu0
    %v897 = vadd.f32 %v284, %v896
    %898 = vdwg.mxu0
    %s899 = sld [smem:[#allocation4 + %s827]]
    // While loop
    $region129: #{tpu_custom_call.1} parent=1 // loop_pre_header
      _
    $region130: #{tpu_custom_call.1} parent=1 // loop_header
      %s901 = sphi 0, %s903
      %p902 = scmp.ge.s32.totalorder %s901, %s899
      %v906 = vphi %v826, %v1027
    $region131: #{tpu_custom_call.1} parent=1 // loop_header_branch
      %905 = sbr.rel (%p902) target = $region135
    $region132: #{tpu_custom_call.1} parent=1 // loop_body
      %v907 = vld [vmem:[#allocation5] sm:$0xff]
      %v908 = vld [vmem:[#allocation5 + $0x8] sm:$0xff]
      %v909 = vld [vmem:[#allocation5 + $0x10] sm:$0xff]
      %v910 = vld [vmem:[#allocation5 + $0x18] sm:$0xff]
      %v911 = vld [vmem:[#allocation5 + $0x20] sm:$0xff]
      %v912 = vld [vmem:[#allocation5 + $0x28] sm:$0xff]
      %v913 = vld [vmem:[#allocation5 + $0x30] sm:$0xff]
      %v914 = vld [vmem:[#allocation5 + $0x38] sm:$0xff]
      %v915 = vld [vmem:[#allocation5 + $0x40] sm:$0xff]
      %v916 = vld [vmem:[#allocation5 + $0x48] sm:$0xff]
      %v917 = vld [vmem:[#allocation5 + $0x50] sm:$0xff]
      %v918 = vld [vmem:[#allocation5 + $0x58] sm:$0xff]
      %v919 = vld [vmem:[#allocation5 + $0x60] sm:$0xff]
      %v920 = vld [vmem:[#allocation5 + $0x68] sm:$0xff]
      %v921 = vld [vmem:[#allocation5 + $0x70] sm:$0xff]
      %v922 = vld [vmem:[#allocation5 + $0x78] sm:$0xff]
      %v924 = vperm.slane %v266, 0
      %926 = vmatpush.msra.mxu0 %v922
      %927 = vmatpush.msra.mxu0 %v921
      %928 = vmatpush.msra.mxu0 %v920
      %929 = vmatpush.msra.mxu0 %v919
      %930 = vmatpush.msra.mxu0 %v918
      %931 = vmatpush.msra.mxu0 %v917
      %932 = vmatpush.msra.mxu0 %v916
      %933 = vmatpush.msra.mxu0 %v915
      %934 = vmatpush.msra.mxu0 %v914
      %935 = vmatpush.msra.mxu0 %v913
      %936 = vmatpush.msra.mxu0 %v912
      %937 = vmatpush.msra.mxu0 %v911
      %938 = vmatpush.msra.mxu0 %v910
      %939 = vmatpush.msra.mxu0 %v909
      %940 = vmatpush.msra.mxu0 %v908
      %941 = vmatpush.msra.mxu0 %v907
      %942 = vmatmul.f32.gmra.mxu0 %v906
      %v943 = vpop.f32.mrf.mxu0
      %v944 = vadd.f32 %v924, %v943
      %945 = vdwg.mxu0
      %v946 = vtanh.pop %v944
      %v947 = vld [vmem:[#allocation10] sm:$0xff]
      %v948 = vld [vmem:[#allocation10 + $0x8] sm:$0xff]
      %v949 = vld [vmem:[#allocation10 + $0x10] sm:$0xff]
      %v950 = vld [vmem:[#allocation10 + $0x18] sm:$0xff]
      %v951 = vld [vmem:[#allocation10 + $0x20] sm:$0xff]
      %v952 = vld [vmem:[#allocation10 + $0x28] sm:$0xff]
      %v953 = vld [vmem:[#allocation10 + $0x30] sm:$0xff]
      %v954 = vld [vmem:[#allocation10 + $0x38] sm:$0xff]
      %v955 = vld [vmem:[#allocation10 + $0x40] sm:$0xff]
      %v956 = vld [vmem:[#allocation10 + $0x48] sm:$0xff]
      %v957 = vld [vmem:[#allocation10 + $0x50] sm:$0xff]
      %v958 = vld [vmem:[#allocation10 + $0x58] sm:$0xff]
      %v959 = vld [vmem:[#allocation10 + $0x60] sm:$0xff]
      %v960 = vld [vmem:[#allocation10 + $0x68] sm:$0xff]
      %v961 = vld [vmem:[#allocation10 + $0x70] sm:$0xff]
      %v962 = vld [vmem:[#allocation10 + $0x78] sm:$0xff]
      %v964 = vperm.slane %v267, 0
      %966 = vmatpush.msra.mxu0 %v962
      %967 = vmatpush.msra.mxu0 %v961
      %968 = vmatpush.msra.mxu0 %v960
      %969 = vmatpush.msra.mxu0 %v959
      %970 = vmatpush.msra.mxu0 %v958
      %971 = vmatpush.msra.mxu0 %v957
      %972 = vmatpush.msra.mxu0 %v956
      %973 = vmatpush.msra.mxu0 %v955
      %974 = vmatpush.msra.mxu0 %v954
      %975 = vmatpush.msra.mxu0 %v953
      %976 = vmatpush.msra.mxu0 %v952
      %977 = vmatpush.msra.mxu0 %v951
      %978 = vmatpush.msra.mxu0 %v950
      %979 = vmatpush.msra.mxu0 %v949
      %980 = vmatpush.msra.mxu0 %v948
      %981 = vmatpush.msra.mxu0 %v947
      %982 = vmatmul.f32.gmra.mxu0 %v946
      %v983 = vpop.f32.mrf.mxu0
      %v984 = vadd.f32 %v964, %v983
      %985 = vdwg.mxu0
      %v986 = vtanh.pop %v984
      %v987 = vld [vmem:[#allocation13] sm:$0xff]
      %v988 = vld [vmem:[#allocation13 + $0x8] sm:$0xff]
      %v989 = vld [vmem:[#allocation13 + $0x10] sm:$0xff]
      %v990 = vld [vmem:[#allocation13 + $0x18] sm:$0xff]
      %v991 = vld [vmem:[#allocation13 + $0x20] sm:$0xff]
      %v992 = vld [vmem:[#allocation13 + $0x28] sm:$0xff]
      %v993 = vld [vmem:[#allocation13 + $0x30] sm:$0xff]
      %v994 = vld [vmem:[#allocation13 + $0x38] sm:$0xff]
      %v995 = vld [vmem:[#allocation13 + $0x40] sm:$0xff]
      %v996 = vld [vmem:[#allocation13 + $0x48] sm:$0xff]
      %v997 = vld [vmem:[#allocation13 + $0x50] sm:$0xff]
      %v998 = vld [vmem:[#allocation13 + $0x58] sm:$0xff]
      %v999 = vld [vmem:[#allocation13 + $0x60] sm:$0xff]
      %v1000 = vld [vmem:[#allocation13 + $0x68] sm:$0xff]
      %v1001 = vld [vmem:[#allocation13 + $0x70] sm:$0xff]
      %v1002 = vld [vmem:[#allocation13 + $0x78] sm:$0xff]
      %v1004 = vperm.slane %v268, 0
      %1006 = vmatpush.msra.mxu0 %v1002
      %1007 = vmatpush.msra.mxu0 %v1001
      %1008 = vmatpush.msra.mxu0 %v1000
      %1009 = vmatpush.msra.mxu0 %v999
      %1010 = vmatpush.msra.mxu0 %v998
      %1011 = vmatpush.msra.mxu0 %v997
      %1012 = vmatpush.msra.mxu0 %v996
      %1013 = vmatpush.msra.mxu0 %v995
      %1014 = vmatpush.msra.mxu0 %v994
      %1015 = vmatpush.msra.mxu0 %v993
      %1016 = vmatpush.msra.mxu0 %v992
      %1017 = vmatpush.msra.mxu0 %v991
      %1018 = vmatpush.msra.mxu0 %v990
      %1019 = vmatpush.msra.mxu0 %v989
      %1020 = vmatpush.msra.mxu0 %v988
      %1021 = vmatpush.msra.mxu0 %v987
      %1022 = vmatmul.f32.gmra.mxu0 %v986
      %v1023 = vpop.f32.mrf.mxu0
      %v1024 = vadd.f32 %v1004, %v1023
      %1025 = vdwg.mxu0
      %v1026 = vmul.f32 %v1024, 0.5
      %v1027 = vadd.f32 %v906, %v1026
    $region133: #{tpu_custom_call.1} parent=1 // loop_footer
      %s903 = sadd.s32 %s901, 1
    $region134: #{tpu_custom_call.1} parent=1 // loop_footer_branch
      %900 = sbr.rel target = $region130
    $region135: #{tpu_custom_call.1} parent=1 // loop_exit
      _
    %v1029 = vsel %vm288, %v833, 0
    %1031 = vmatpush.msra.mxu0 0.0
    %1032 = vmatpush.msra.mxu0 0.0
    %1033 = vmatpush.msra.mxu0 0.0
    %1034 = vmatpush.msra.mxu0 0.0
    %1035 = vmatpush.msra.mxu0 0.0
    %1036 = vmatpush.msra.mxu0 0.0
    %1037 = vmatpush.msra.mxu0 0.0
    %1038 = vmatpush.msra.mxu0 0.0
    %1039 = vmatpush.msra.mxu0 0.0
    %1040 = vmatpush.msra.mxu0 0.0
    %1041 = vmatpush.msra.mxu0 0.0
    %1042 = vmatpush.msra.mxu0 0.0
    %1043 = vmatpush.msra.mxu0 0.0
    %1044 = vmatpush.msra.mxu0 0.0
    %1045 = vmatpush.msra.mxu0 0.0
    %1046 = vmatpush.msra.mxu0 %v906
    %1047 = vmatmul.f32.gmra.mxu0 %v1029
    %v1048 = vpop.f32.mrf.mxu0
    %v1049 = vadd.f32 0.0, %v1048
    %1050 = vdwg.mxu0
    %1051 = vmatpush.msra.mxu0 %v564
    %1052 = vmatpush.msra.mxu0 %v560
    %1053 = vmatpush.msra.mxu0 %v556
    %1054 = vmatpush.msra.mxu0 %v552
    %1055 = vmatpush.msra.mxu0 %v548
    %1056 = vmatpush.msra.mxu0 %v544
    %1057 = vmatpush.msra.mxu0 %v540
    %1058 = vmatpush.msra.mxu0 %v536
    %1059 = vmatpush.msra.mxu0 %v532
    %1060 = vmatpush.msra.mxu0 %v528
    %1061 = vmatpush.msra.mxu0 %v524
    %1062 = vmatpush.msra.mxu0 %v520
    %1063 = vmatpush.msra.mxu0 %v516
    %1064 = vmatpush.msra.mxu0 %v512
    %1065 = vmatpush.msra.mxu0 %v508
    %1066 = vmatpush.msra.mxu0 %v504
    %1067 = vmatmul.f32.gmra.mxu0 %v1049
    %v1068 = vpop.f32.mrf.mxu0
    %v1069 = vadd.f32 %v569, %v1068
    %1070 = vdwg.mxu0
    %1071 = vmatpush.msra.mxu0 %v565
    %1072 = vmatpush.msra.mxu0 %v561
    %1073 = vmatpush.msra.mxu0 %v557
    %1074 = vmatpush.msra.mxu0 %v553
    %1075 = vmatpush.msra.mxu0 %v549
    %1076 = vmatpush.msra.mxu0 %v545
    %1077 = vmatpush.msra.mxu0 %v541
    %1078 = vmatpush.msra.mxu0 %v537
    %1079 = vmatpush.msra.mxu0 %v533
    %1080 = vmatpush.msra.mxu0 %v529
    %1081 = vmatpush.msra.mxu0 %v525
    %1082 = vmatpush.msra.mxu0 %v521
    %1083 = vmatpush.msra.mxu0 %v517
    %1084 = vmatpush.msra.mxu0 %v513
    %1085 = vmatpush.msra.mxu0 %v509
    %1086 = vmatpush.msra.mxu0 %v505
    %1087 = vmatmul.f32.gmra.mxu0 %v1049
    %v1088 = vpop.f32.mrf.mxu0
    %v1089 = vadd.f32 %v570, %v1088
    %1090 = vdwg.mxu0
    %1091 = vmatpush.msra.mxu0 %v566
    %1092 = vmatpush.msra.mxu0 %v562
    %1093 = vmatpush.msra.mxu0 %v558
    %1094 = vmatpush.msra.mxu0 %v554
    %1095 = vmatpush.msra.mxu0 %v550
    %1096 = vmatpush.msra.mxu0 %v546
    %1097 = vmatpush.msra.mxu0 %v542
    %1098 = vmatpush.msra.mxu0 %v538
    %1099 = vmatpush.msra.mxu0 %v534
    %1100 = vmatpush.msra.mxu0 %v530
    %1101 = vmatpush.msra.mxu0 %v526
    %1102 = vmatpush.msra.mxu0 %v522
    %1103 = vmatpush.msra.mxu0 %v518
    %1104 = vmatpush.msra.mxu0 %v514
    %1105 = vmatpush.msra.mxu0 %v510
    %1106 = vmatpush.msra.mxu0 %v506
    %1107 = vmatmul.f32.gmra.mxu0 %v1049
    %v1108 = vpop.f32.mrf.mxu0
    %v1109 = vadd.f32 %v571, %v1108
    %1110 = vdwg.mxu0
    %1111 = vmatpush.msra.mxu0 %v567
    %1112 = vmatpush.msra.mxu0 %v563
    %1113 = vmatpush.msra.mxu0 %v559
    %1114 = vmatpush.msra.mxu0 %v555
    %1115 = vmatpush.msra.mxu0 %v551
    %1116 = vmatpush.msra.mxu0 %v547
    %1117 = vmatpush.msra.mxu0 %v543
    %1118 = vmatpush.msra.mxu0 %v539
    %1119 = vmatpush.msra.mxu0 %v535
    %1120 = vmatpush.msra.mxu0 %v531
    %1121 = vmatpush.msra.mxu0 %v527
    %1122 = vmatpush.msra.mxu0 %v523
    %1123 = vmatpush.msra.mxu0 %v519
    %1124 = vmatpush.msra.mxu0 %v515
    %1125 = vmatpush.msra.mxu0 %v511
    %1126 = vmatpush.msra.mxu0 %v507
    %1127 = vmatmul.f32.gmra.mxu0 %v1049
    %v1128 = vpop.f32.mrf.mxu0
    %v1129 = vadd.f32 %v572, %v1128
    %1130 = vdwg.mxu0
    %v1131 = vmax.f32 %v1069, 0.0
    %1132 = vmatpush.msra.mxu0 %v673
    %1133 = vmatpush.msra.mxu0 %v672
    %1134 = vmatpush.msra.mxu0 %v671
    %1135 = vmatpush.msra.mxu0 %v670
    %1136 = vmatpush.msra.mxu0 %v669
    %1137 = vmatpush.msra.mxu0 %v668
    %1138 = vmatpush.msra.mxu0 %v667
    %1139 = vmatpush.msra.mxu0 %v666
    %1140 = vmatpush.msra.mxu0 %v665
    %1141 = vmatpush.msra.mxu0 %v664
    %1142 = vmatpush.msra.mxu0 %v663
    %1143 = vmatpush.msra.mxu0 %v662
    %1144 = vmatpush.msra.mxu0 %v661
    %1145 = vmatpush.msra.mxu0 %v660
    %1146 = vmatpush.msra.mxu0 %v659
    %1147 = vmatpush.msra.mxu0 %v658
    %1148 = vmatmul.f32.gmra.mxu0 %v1131
    %v1149 = vpop.f32.mrf.mxu0
    %v1150 = vadd.f32 %v675, %v1149
    %1151 = vdwg.mxu0
    %v1152 = vsub.f32 %v829, %v1150
    %v1153 = vmul.f32 %v1152, %v1152
    %v1154 = vmul.f32 %v1153, %v831
    %v1155 = vadd.f32 %v700, %v1154
    %v1156 = vand.u32 2147483647, %v1152
    %v1157 = vmul.f32 %v1156, %v831
    %v1158 = vadd.f32 %v703, %v1157
    %v1159 = vadd.f32 %v829, 1e-08
    %v1160 = vrcp.pop %v1159
    %v1161 = vmul.f32 %v1159, %v1160
    %v1162 = vsub.f32 1.0, %v1161
    %v1163 = vmul.f32 %v1160, %v1162
    %v1164 = vadd.f32 %v1160, %v1163
    %vm1165 = vweird.f32 %v1159
    %vm1166 = vweird.f32 %v1160
    %vm1167 = vmor %vm1165, %vm1166
    %v1168 = vsel %vm1167, %v1160, %v1164
    %v1169 = vand.u32 2147483647, %v1159
    %vm1170 = vcmp.eq.f32.partialorder %v1169, 8.507059e+37
    %v1171 = vand.u32 %v1159, 2147483648
    %v1172 = vor.u32 1.1754944e-38, %v1171
    %v1173 = vsel %vm1170, %v1172, %v1168
    %v1174 = vmul.f32 %v1156, %v1173
    %v1175 = vmul.f32 %v1174, %v831
    %v1176 = vadd.f32 %v721, %v1175
    %v1177 = vadd.f32 %v722, %v831
    %v1178 = vadd.f32 %v857, %v1089
    %v1179 = vxor.u32 %v1178, 2147483648
    %v1180 = vmul.f32 %v1179, 1.442695
    %v1181 = vpow.pop %v1180
    %v1182 = vadd.f32 %v1181, 1.0
    %v1183 = vrcp.pop %v1182
    %v1184 = vmul.f32 %v1182, %v1183
    %v1185 = vsub.f32 1.0, %v1184
    %v1186 = vmul.f32 %v1183, %v1185
    %v1187 = vadd.f32 %v1183, %v1186
    %vm1188 = vweird.f32 %v1182
    %vm1189 = vweird.f32 %v1183
    %vm1190 = vmor %vm1188, %vm1189
    %v1191 = vsel %vm1190, %v1183, %v1187
    %v1192 = vand.u32 2147483647, %v1182
    %vm1193 = vcmp.eq.f32.partialorder %v1192, 8.507059e+37
    %v1194 = vand.u32 %v1182, 2147483648
    %v1195 = vor.u32 1.1754944e-38, %v1194
    %v1196 = vsel %vm1193, %v1195, %v1191
    %v1197 = vmul.f32 1.0, %v1196
    %v1198 = vadd.f32 %v877, %v1109
    %v1199 = vxor.u32 %v1198, 2147483648
    %v1200 = vmul.f32 %v1199, 1.442695
    %v1201 = vpow.pop %v1200
    %v1202 = vadd.f32 %v1201, 1.0
    %v1203 = vrcp.pop %v1202
    %v1204 = vmul.f32 %v1202, %v1203
    %v1205 = vsub.f32 1.0, %v1204
    %v1206 = vmul.f32 %v1203, %v1205
    %v1207 = vadd.f32 %v1203, %v1206
    %vm1208 = vweird.f32 %v1202
    %vm1209 = vweird.f32 %v1203
    %vm1210 = vmor %vm1208, %vm1209
    %v1211 = vsel %vm1210, %v1203, %v1207
    %v1212 = vand.u32 2147483647, %v1202
    %vm1213 = vcmp.eq.f32.partialorder %v1212, 8.507059e+37
    %v1214 = vand.u32 %v1202, 2147483648
    %v1215 = vor.u32 1.1754944e-38, %v1214
    %v1216 = vsel %vm1213, %v1215, %v1211
    %v1217 = vmul.f32 1.0, %v1216
    %v1218 = vmul.f32 %v1197, %v1129
    %v1219 = vadd.f32 %v897, %v1218
    %v1220 = vtanh.pop %v1219
    %v1221 = vsub.f32 1.0, %v1217
    %v1222 = vmul.f32 %v1221, %v1220
    %v1223 = vmul.f32 %v1217, %v1049
    %v1224 = vadd.f32 %v1222, %v1223
    %v1225 = vsub.f32 %v1224, %v1049
    %1226 = vxpose.xlu0.b32.start [1/16] %v833, 128
    %1227 = vxpose.xlu0.b32.cont [2/16] 0.0, 128
    %1228 = vxpose.xlu0.b32.cont [3/16] 0.0, 128
    %1229 = vxpose.xlu0.b32.cont [4/16] 0.0, 128
    %1230 = vxpose.xlu0.b32.cont [5/16] 0.0, 128
    %1231 = vxpose.xlu0.b32.cont [6/16] 0.0, 128
    %1232 = vxpose.xlu0.b32.cont [7/16] 0.0, 128
    %1233 = vxpose.xlu0.b32.cont [8/16] 0.0, 128
    %1234 = vxpose.xlu0.b32.cont [9/16] 0.0, 128
    %1235 = vxpose.xlu0.b32.cont [10/16] 0.0, 128
    %1236 = vxpose.xlu0.b32.cont [11/16] 0.0, 128
    %1237 = vxpose.xlu0.b32.cont [12/16] 0.0, 128
    %1238 = vxpose.xlu0.b32.cont [13/16] 0.0, 128
    %1239 = vxpose.xlu0.b32.cont [14/16] 0.0, 128
    %1240 = vxpose.xlu0.b32.cont [15/16] 0.0, 128
    %1241 = vxpose.xlu0.b32.end [16/16] 0.0, 128
    %v1242 = vpop.trf.xlu0
    %v1243 = vpop.trf.xlu0
    %v1244 = vpop.trf.xlu0
    %v1245 = vpop.trf.xlu0
    %v1246 = vpop.trf.xlu0
    %v1247 = vpop.trf.xlu0
    %v1248 = vpop.trf.xlu0
    %v1249 = vpop.trf.xlu0
    %v1250 = vpop.trf.xlu0
    %v1251 = vpop.trf.xlu0
    %v1252 = vpop.trf.xlu0
    %v1253 = vpop.trf.xlu0
    %v1254 = vpop.trf.xlu0
    %v1255 = vpop.trf.xlu0
    %v1256 = vpop.trf.xlu0
    %v1257 = vpop.trf.xlu0
    %v1259 = vsel %vm288, %v1242, 0
    %1261 = vmatpush.msra.mxu0 0.0
    %1262 = vmatpush.msra.mxu0 0.0
    %1263 = vmatpush.msra.mxu0 0.0
    %1264 = vmatpush.msra.mxu0 0.0
    %1265 = vmatpush.msra.mxu0 0.0
    %1266 = vmatpush.msra.mxu0 0.0
    %1267 = vmatpush.msra.mxu0 0.0
    %1268 = vmatpush.msra.mxu0 0.0
    %1269 = vmatpush.msra.mxu0 0.0
    %1270 = vmatpush.msra.mxu0 0.0
    %1271 = vmatpush.msra.mxu0 0.0
    %1272 = vmatpush.msra.mxu0 0.0
    %1273 = vmatpush.msra.mxu0 0.0
    %1274 = vmatpush.msra.mxu0 0.0
    %1275 = vmatpush.msra.mxu0 0.0
    %1276 = vmatpush.msra.mxu0 %v1225
    %1277 = vmatmul.f32.gmra.mxu0 %v1259
    %v1278 = vpop.f32.mrf.mxu0
    %v1279 = vadd.f32 0.0, %v1278
    %1280 = vdwg.mxu0
    %v1281 = vadd.f32 %v906, %v1279
    %s1282 = sadd.s32 %s273, 2
    %s1283 = scalar_lea.vmem [#allocation20], 16
    %v1284 = vld [vmem:[%s1283] sm:$0xff]
    %s1285 = scalar_lea.vmem [#allocation22], 16
    %v1286 = vld [vmem:[%s1285] sm:$0xff]
    %s1287 = scalar_lea.vmem [#allocation25], 16
    %v1288 = vld [vmem:[%s1287] sm:$0xff]
    %s1289 = scalar_lea.vmem [#allocation23], 16
    %v1290 = vld [vmem:[%s1289] sm:$0xff]
    %v1292 = vsel %vm288, %v1290, 0
    %1294 = vmatpush.msra.mxu0 0.0
    %1295 = vmatpush.msra.mxu0 0.0
    %1296 = vmatpush.msra.mxu0 0.0
    %1297 = vmatpush.msra.mxu0 0.0
    %1298 = vmatpush.msra.mxu0 0.0
    %1299 = vmatpush.msra.mxu0 0.0
    %1300 = vmatpush.msra.mxu0 0.0
    %1301 = vmatpush.msra.mxu0 0.0
    %1302 = vmatpush.msra.mxu0 0.0
    %1303 = vmatpush.msra.mxu0 0.0
    %1304 = vmatpush.msra.mxu0 0.0
    %1305 = vmatpush.msra.mxu0 0.0
    %1306 = vmatpush.msra.mxu0 0.0
    %1307 = vmatpush.msra.mxu0 0.0
    %1308 = vmatpush.msra.mxu0 0.0
    %1309 = vmatpush.msra.mxu0 %v278
    %1310 = vmatmul.f32.gmra.mxu0 %v1292
    %v1311 = vpop.f32.mrf.mxu0
    %v1312 = vadd.f32 %v282, %v1311
    %1313 = vdwg.mxu0
    %1314 = vmatpush.msra.mxu0 0.0
    %1315 = vmatpush.msra.mxu0 0.0
    %1316 = vmatpush.msra.mxu0 0.0
    %1317 = vmatpush.msra.mxu0 0.0
    %1318 = vmatpush.msra.mxu0 0.0
    %1319 = vmatpush.msra.mxu0 0.0
    %1320 = vmatpush.msra.mxu0 0.0
    %1321 = vmatpush.msra.mxu0 0.0
    %1322 = vmatpush.msra.mxu0 0.0
    %1323 = vmatpush.msra.mxu0 0.0
    %1324 = vmatpush.msra.mxu0 0.0
    %1325 = vmatpush.msra.mxu0 0.0
    %1326 = vmatpush.msra.mxu0 0.0
    %1327 = vmatpush.msra.mxu0 0.0
    %1328 = vmatpush.msra.mxu0 0.0
    %1329 = vmatpush.msra.mxu0 %v279
    %1330 = vmatmul.f32.gmra.mxu0 %v1292
    %v1331 = vpop.f32.mrf.mxu0
    %v1332 = vadd.f32 %v283, %v1331
    %1333 = vdwg.mxu0
    %1334 = vmatpush.msra.mxu0 0.0
    %1335 = vmatpush.msra.mxu0 0.0
    %1336 = vmatpush.msra.mxu0 0.0
    %1337 = vmatpush.msra.mxu0 0.0
    %1338 = vmatpush.msra.mxu0 0.0
    %1339 = vmatpush.msra.mxu0 0.0
    %1340 = vmatpush.msra.mxu0 0.0
    %1341 = vmatpush.msra.mxu0 0.0
    %1342 = vmatpush.msra.mxu0 0.0
    %1343 = vmatpush.msra.mxu0 0.0
    %1344 = vmatpush.msra.mxu0 0.0
    %1345 = vmatpush.msra.mxu0 0.0
    %1346 = vmatpush.msra.mxu0 0.0
    %1347 = vmatpush.msra.mxu0 0.0
    %1348 = vmatpush.msra.mxu0 0.0
    %1349 = vmatpush.msra.mxu0 %v280
    %1350 = vmatmul.f32.gmra.mxu0 %v1292
    %v1351 = vpop.f32.mrf.mxu0
    %v1352 = vadd.f32 %v284, %v1351
    %1353 = vdwg.mxu0
    %s1354 = sld [smem:[#allocation4 + %s1282]]
    // While loop
    $region136: #{tpu_custom_call.1} parent=1 // loop_pre_header
      _
    $region137: #{tpu_custom_call.1} parent=1 // loop_header
      %s1356 = sphi 0, %s1358
      %p1357 = scmp.ge.s32.totalorder %s1356, %s1354
      %v1361 = vphi %v1281, %v1482
    $region138: #{tpu_custom_call.1} parent=1 // loop_header_branch
      %1360 = sbr.rel (%p1357) target = $region142
    $region139: #{tpu_custom_call.1} parent=1 // loop_body
      %v1362 = vld [vmem:[#allocation5] sm:$0xff]
      %v1363 = vld [vmem:[#allocation5 + $0x8] sm:$0xff]
      %v1364 = vld [vmem:[#allocation5 + $0x10] sm:$0xff]
      %v1365 = vld [vmem:[#allocation5 + $0x18] sm:$0xff]
      %v1366 = vld [vmem:[#allocation5 + $0x20] sm:$0xff]
      %v1367 = vld [vmem:[#allocation5 + $0x28] sm:$0xff]
      %v1368 = vld [vmem:[#allocation5 + $0x30] sm:$0xff]
      %v1369 = vld [vmem:[#allocation5 + $0x38] sm:$0xff]
      %v1370 = vld [vmem:[#allocation5 + $0x40] sm:$0xff]
      %v1371 = vld [vmem:[#allocation5 + $0x48] sm:$0xff]
      %v1372 = vld [vmem:[#allocation5 + $0x50] sm:$0xff]
      %v1373 = vld [vmem:[#allocation5 + $0x58] sm:$0xff]
      %v1374 = vld [vmem:[#allocation5 + $0x60] sm:$0xff]
      %v1375 = vld [vmem:[#allocation5 + $0x68] sm:$0xff]
      %v1376 = vld [vmem:[#allocation5 + $0x70] sm:$0xff]
      %v1377 = vld [vmem:[#allocation5 + $0x78] sm:$0xff]
      %v1379 = vperm.slane %v266, 0
      %1381 = vmatpush.msra.mxu0 %v1377
      %1382 = vmatpush.msra.mxu0 %v1376
      %1383 = vmatpush.msra.mxu0 %v1375
      %1384 = vmatpush.msra.mxu0 %v1374
      %1385 = vmatpush.msra.mxu0 %v1373
      %1386 = vmatpush.msra.mxu0 %v1372
      %1387 = vmatpush.msra.mxu0 %v1371
      %1388 = vmatpush.msra.mxu0 %v1370
      %1389 = vmatpush.msra.mxu0 %v1369
      %1390 = vmatpush.msra.mxu0 %v1368
      %1391 = vmatpush.msra.mxu0 %v1367
      %1392 = vmatpush.msra.mxu0 %v1366
      %1393 = vmatpush.msra.mxu0 %v1365
      %1394 = vmatpush.msra.mxu0 %v1364
      %1395 = vmatpush.msra.mxu0 %v1363
      %1396 = vmatpush.msra.mxu0 %v1362
      %1397 = vmatmul.f32.gmra.mxu0 %v1361
      %v1398 = vpop.f32.mrf.mxu0
      %v1399 = vadd.f32 %v1379, %v1398
      %1400 = vdwg.mxu0
      %v1401 = vtanh.pop %v1399
      %v1402 = vld [vmem:[#allocation10] sm:$0xff]
      %v1403 = vld [vmem:[#allocation10 + $0x8] sm:$0xff]
      %v1404 = vld [vmem:[#allocation10 + $0x10] sm:$0xff]
      %v1405 = vld [vmem:[#allocation10 + $0x18] sm:$0xff]
      %v1406 = vld [vmem:[#allocation10 + $0x20] sm:$0xff]
      %v1407 = vld [vmem:[#allocation10 + $0x28] sm:$0xff]
      %v1408 = vld [vmem:[#allocation10 + $0x30] sm:$0xff]
      %v1409 = vld [vmem:[#allocation10 + $0x38] sm:$0xff]
      %v1410 = vld [vmem:[#allocation10 + $0x40] sm:$0xff]
      %v1411 = vld [vmem:[#allocation10 + $0x48] sm:$0xff]
      %v1412 = vld [vmem:[#allocation10 + $0x50] sm:$0xff]
      %v1413 = vld [vmem:[#allocation10 + $0x58] sm:$0xff]
      %v1414 = vld [vmem:[#allocation10 + $0x60] sm:$0xff]
      %v1415 = vld [vmem:[#allocation10 + $0x68] sm:$0xff]
      %v1416 = vld [vmem:[#allocation10 + $0x70] sm:$0xff]
      %v1417 = vld [vmem:[#allocation10 + $0x78] sm:$0xff]
      %v1419 = vperm.slane %v267, 0
      %1421 = vmatpush.msra.mxu0 %v1417
      %1422 = vmatpush.msra.mxu0 %v1416
      %1423 = vmatpush.msra.mxu0 %v1415
      %1424 = vmatpush.msra.mxu0 %v1414
      %1425 = vmatpush.msra.mxu0 %v1413
      %1426 = vmatpush.msra.mxu0 %v1412
      %1427 = vmatpush.msra.mxu0 %v1411
      %1428 = vmatpush.msra.mxu0 %v1410
      %1429 = vmatpush.msra.mxu0 %v1409
      %1430 = vmatpush.msra.mxu0 %v1408
      %1431 = vmatpush.msra.mxu0 %v1407
      %1432 = vmatpush.msra.mxu0 %v1406
      %1433 = vmatpush.msra.mxu0 %v1405
      %1434 = vmatpush.msra.mxu0 %v1404
      %1435 = vmatpush.msra.mxu0 %v1403
      %1436 = vmatpush.msra.mxu0 %v1402
      %1437 = vmatmul.f32.gmra.mxu0 %v1401
      %v1438 = vpop.f32.mrf.mxu0
      %v1439 = vadd.f32 %v1419, %v1438
      %1440 = vdwg.mxu0
      %v1441 = vtanh.pop %v1439
      %v1442 = vld [vmem:[#allocation13] sm:$0xff]
      %v1443 = vld [vmem:[#allocation13 + $0x8] sm:$0xff]
      %v1444 = vld [vmem:[#allocation13 + $0x10] sm:$0xff]
      %v1445 = vld [vmem:[#allocation13 + $0x18] sm:$0xff]
      %v1446 = vld [vmem:[#allocation13 + $0x20] sm:$0xff]
      %v1447 = vld [vmem:[#allocation13 + $0x28] sm:$0xff]
      %v1448 = vld [vmem:[#allocation13 + $0x30] sm:$0xff]
      %v1449 = vld [vmem:[#allocation13 + $0x38] sm:$0xff]
      %v1450 = vld [vmem:[#allocation13 + $0x40] sm:$0xff]
      %v1451 = vld [vmem:[#allocation13 + $0x48] sm:$0xff]
      %v1452 = vld [vmem:[#allocation13 + $0x50] sm:$0xff]
      %v1453 = vld [vmem:[#allocation13 + $0x58] sm:$0xff]
      %v1454 = vld [vmem:[#allocation13 + $0x60] sm:$0xff]
      %v1455 = vld [vmem:[#allocation13 + $0x68] sm:$0xff]
      %v1456 = vld [vmem:[#allocation13 + $0x70] sm:$0xff]
      %v1457 = vld [vmem:[#allocation13 + $0x78] sm:$0xff]
      %v1459 = vperm.slane %v268, 0
      %1461 = vmatpush.msra.mxu0 %v1457
      %1462 = vmatpush.msra.mxu0 %v1456
      %1463 = vmatpush.msra.mxu0 %v1455
      %1464 = vmatpush.msra.mxu0 %v1454
      %1465 = vmatpush.msra.mxu0 %v1453
      %1466 = vmatpush.msra.mxu0 %v1452
      %1467 = vmatpush.msra.mxu0 %v1451
      %1468 = vmatpush.msra.mxu0 %v1450
      %1469 = vmatpush.msra.mxu0 %v1449
      %1470 = vmatpush.msra.mxu0 %v1448
      %1471 = vmatpush.msra.mxu0 %v1447
      %1472 = vmatpush.msra.mxu0 %v1446
      %1473 = vmatpush.msra.mxu0 %v1445
      %1474 = vmatpush.msra.mxu0 %v1444
      %1475 = vmatpush.msra.mxu0 %v1443
      %1476 = vmatpush.msra.mxu0 %v1442
      %1477 = vmatmul.f32.gmra.mxu0 %v1441
      %v1478 = vpop.f32.mrf.mxu0
      %v1479 = vadd.f32 %v1459, %v1478
      %1480 = vdwg.mxu0
      %v1481 = vmul.f32 %v1479, 0.5
      %v1482 = vadd.f32 %v1361, %v1481
    $region140: #{tpu_custom_call.1} parent=1 // loop_footer
      %s1358 = sadd.s32 %s1356, 1
    $region141: #{tpu_custom_call.1} parent=1 // loop_footer_branch
      %1355 = sbr.rel target = $region137
    $region142: #{tpu_custom_call.1} parent=1 // loop_exit
      _
    %v1484 = vsel %vm288, %v1288, 0
    %1486 = vmatpush.msra.mxu0 0.0
    %1487 = vmatpush.msra.mxu0 0.0
    %1488 = vmatpush.msra.mxu0 0.0
    %1489 = vmatpush.msra.mxu0 0.0
    %1490 = vmatpush.msra.mxu0 0.0
    %1491 = vmatpush.msra.mxu0 0.0
    %1492 = vmatpush.msra.mxu0 0.0
    %1493 = vmatpush.msra.mxu0 0.0
    %1494 = vmatpush.msra.mxu0 0.0
    %1495 = vmatpush.msra.mxu0 0.0
    %1496 = vmatpush.msra.mxu0 0.0
    %1497 = vmatpush.msra.mxu0 0.0
    %1498 = vmatpush.msra.mxu0 0.0
    %1499 = vmatpush.msra.mxu0 0.0
    %1500 = vmatpush.msra.mxu0 0.0
    %1501 = vmatpush.msra.mxu0 %v1361
    %1502 = vmatmul.f32.gmra.mxu0 %v1484
    %v1503 = vpop.f32.mrf.mxu0
    %v1504 = vadd.f32 0.0, %v1503
    %1505 = vdwg.mxu0
    %1506 = vmatpush.msra.mxu0 %v564
    %1507 = vmatpush.msra.mxu0 %v560
    %1508 = vmatpush.msra.mxu0 %v556
    %1509 = vmatpush.msra.mxu0 %v552
    %1510 = vmatpush.msra.mxu0 %v548
    %1511 = vmatpush.msra.mxu0 %v544
    %1512 = vmatpush.msra.mxu0 %v540
    %1513 = vmatpush.msra.mxu0 %v536
    %1514 = vmatpush.msra.mxu0 %v532
    %1515 = vmatpush.msra.mxu0 %v528
    %1516 = vmatpush.msra.mxu0 %v524
    %1517 = vmatpush.msra.mxu0 %v520
    %1518 = vmatpush.msra.mxu0 %v516
    %1519 = vmatpush.msra.mxu0 %v512
    %1520 = vmatpush.msra.mxu0 %v508
    %1521 = vmatpush.msra.mxu0 %v504
    %1522 = vmatmul.f32.gmra.mxu0 %v1504
    %v1523 = vpop.f32.mrf.mxu0
    %v1524 = vadd.f32 %v569, %v1523
    %1525 = vdwg.mxu0
    %1526 = vmatpush.msra.mxu0 %v565
    %1527 = vmatpush.msra.mxu0 %v561
    %1528 = vmatpush.msra.mxu0 %v557
    %1529 = vmatpush.msra.mxu0 %v553
    %1530 = vmatpush.msra.mxu0 %v549
    %1531 = vmatpush.msra.mxu0 %v545
    %1532 = vmatpush.msra.mxu0 %v541
    %1533 = vmatpush.msra.mxu0 %v537
    %1534 = vmatpush.msra.mxu0 %v533
    %1535 = vmatpush.msra.mxu0 %v529
    %1536 = vmatpush.msra.mxu0 %v525
    %1537 = vmatpush.msra.mxu0 %v521
    %1538 = vmatpush.msra.mxu0 %v517
    %1539 = vmatpush.msra.mxu0 %v513
    %1540 = vmatpush.msra.mxu0 %v509
    %1541 = vmatpush.msra.mxu0 %v505
    %1542 = vmatmul.f32.gmra.mxu0 %v1504
    %v1543 = vpop.f32.mrf.mxu0
    %v1544 = vadd.f32 %v570, %v1543
    %1545 = vdwg.mxu0
    %1546 = vmatpush.msra.mxu0 %v566
    %1547 = vmatpush.msra.mxu0 %v562
    %1548 = vmatpush.msra.mxu0 %v558
    %1549 = vmatpush.msra.mxu0 %v554
    %1550 = vmatpush.msra.mxu0 %v550
    %1551 = vmatpush.msra.mxu0 %v546
    %1552 = vmatpush.msra.mxu0 %v542
    %1553 = vmatpush.msra.mxu0 %v538
    %1554 = vmatpush.msra.mxu0 %v534
    %1555 = vmatpush.msra.mxu0 %v530
    %1556 = vmatpush.msra.mxu0 %v526
    %1557 = vmatpush.msra.mxu0 %v522
    %1558 = vmatpush.msra.mxu0 %v518
    %1559 = vmatpush.msra.mxu0 %v514
    %1560 = vmatpush.msra.mxu0 %v510
    %1561 = vmatpush.msra.mxu0 %v506
    %1562 = vmatmul.f32.gmra.mxu0 %v1504
    %v1563 = vpop.f32.mrf.mxu0
    %v1564 = vadd.f32 %v571, %v1563
    %1565 = vdwg.mxu0
    %1566 = vmatpush.msra.mxu0 %v567
    %1567 = vmatpush.msra.mxu0 %v563
    %1568 = vmatpush.msra.mxu0 %v559
    %1569 = vmatpush.msra.mxu0 %v555
    %1570 = vmatpush.msra.mxu0 %v551
    %1571 = vmatpush.msra.mxu0 %v547
    %1572 = vmatpush.msra.mxu0 %v543
    %1573 = vmatpush.msra.mxu0 %v539
    %1574 = vmatpush.msra.mxu0 %v535
    %1575 = vmatpush.msra.mxu0 %v531
    %1576 = vmatpush.msra.mxu0 %v527
    %1577 = vmatpush.msra.mxu0 %v523
    %1578 = vmatpush.msra.mxu0 %v519
    %1579 = vmatpush.msra.mxu0 %v515
    %1580 = vmatpush.msra.mxu0 %v511
    %1581 = vmatpush.msra.mxu0 %v507
    %1582 = vmatmul.f32.gmra.mxu0 %v1504
    %v1583 = vpop.f32.mrf.mxu0
    %v1584 = vadd.f32 %v572, %v1583
    %1585 = vdwg.mxu0
    %v1586 = vmax.f32 %v1524, 0.0
    %1587 = vmatpush.msra.mxu0 %v673
    %1588 = vmatpush.msra.mxu0 %v672
    %1589 = vmatpush.msra.mxu0 %v671
    %1590 = vmatpush.msra.mxu0 %v670
    %1591 = vmatpush.msra.mxu0 %v669
    %1592 = vmatpush.msra.mxu0 %v668
    %1593 = vmatpush.msra.mxu0 %v667
    %1594 = vmatpush.msra.mxu0 %v666
    %1595 = vmatpush.msra.mxu0 %v665
    %1596 = vmatpush.msra.mxu0 %v664
    %1597 = vmatpush.msra.mxu0 %v663
    %1598 = vmatpush.msra.mxu0 %v662
    %1599 = vmatpush.msra.mxu0 %v661
    %1600 = vmatpush.msra.mxu0 %v660
    %1601 = vmatpush.msra.mxu0 %v659
    %1602 = vmatpush.msra.mxu0 %v658
    %1603 = vmatmul.f32.gmra.mxu0 %v1586
    %v1604 = vpop.f32.mrf.mxu0
    %v1605 = vadd.f32 %v675, %v1604
    %1606 = vdwg.mxu0
    %v1607 = vsub.f32 %v1284, %v1605
    %v1608 = vmul.f32 %v1607, %v1607
    %v1609 = vmul.f32 %v1608, %v1286
    %v1610 = vadd.f32 %v1155, %v1609
    %v1611 = vand.u32 2147483647, %v1607
    %v1612 = vmul.f32 %v1611, %v1286
    %v1613 = vadd.f32 %v1158, %v1612
    %v1614 = vadd.f32 %v1284, 1e-08
    %v1615 = vrcp.pop %v1614
    %v1616 = vmul.f32 %v1614, %v1615
    %v1617 = vsub.f32 1.0, %v1616
    %v1618 = vmul.f32 %v1615, %v1617
    %v1619 = vadd.f32 %v1615, %v1618
    %vm1620 = vweird.f32 %v1614
    %vm1621 = vweird.f32 %v1615
    %vm1622 = vmor %vm1620, %vm1621
    %v1623 = vsel %vm1622, %v1615, %v1619
    %v1624 = vand.u32 2147483647, %v1614
    %vm1625 = vcmp.eq.f32.partialorder %v1624, 8.507059e+37
    %v1626 = vand.u32 %v1614, 2147483648
    %v1627 = vor.u32 1.1754944e-38, %v1626
    %v1628 = vsel %vm1625, %v1627, %v1623
    %v1629 = vmul.f32 %v1611, %v1628
    %v1630 = vmul.f32 %v1629, %v1286
    %v1631 = vadd.f32 %v1176, %v1630
    %v1632 = vadd.f32 %v1177, %v1286
    %v1633 = vadd.f32 %v1312, %v1544
    %v1634 = vxor.u32 %v1633, 2147483648
    %v1635 = vmul.f32 %v1634, 1.442695
    %v1636 = vpow.pop %v1635
    %v1637 = vadd.f32 %v1636, 1.0
    %v1638 = vrcp.pop %v1637
    %v1639 = vmul.f32 %v1637, %v1638
    %v1640 = vsub.f32 1.0, %v1639
    %v1641 = vmul.f32 %v1638, %v1640
    %v1642 = vadd.f32 %v1638, %v1641
    %vm1643 = vweird.f32 %v1637
    %vm1644 = vweird.f32 %v1638
    %vm1645 = vmor %vm1643, %vm1644
    %v1646 = vsel %vm1645, %v1638, %v1642
    %v1647 = vand.u32 2147483647, %v1637
    %vm1648 = vcmp.eq.f32.partialorder %v1647, 8.507059e+37
    %v1649 = vand.u32 %v1637, 2147483648
    %v1650 = vor.u32 1.1754944e-38, %v1649
    %v1651 = vsel %vm1648, %v1650, %v1646
    %v1652 = vmul.f32 1.0, %v1651
    %v1653 = vadd.f32 %v1332, %v1564
    %v1654 = vxor.u32 %v1653, 2147483648
    %v1655 = vmul.f32 %v1654, 1.442695
    %v1656 = vpow.pop %v1655
    %v1657 = vadd.f32 %v1656, 1.0
    %v1658 = vrcp.pop %v1657
    %v1659 = vmul.f32 %v1657, %v1658
    %v1660 = vsub.f32 1.0, %v1659
    %v1661 = vmul.f32 %v1658, %v1660
    %v1662 = vadd.f32 %v1658, %v1661
    %vm1663 = vweird.f32 %v1657
    %vm1664 = vweird.f32 %v1658
    %vm1665 = vmor %vm1663, %vm1664
    %v1666 = vsel %vm1665, %v1658, %v1662
    %v1667 = vand.u32 2147483647, %v1657
    %vm1668 = vcmp.eq.f32.partialorder %v1667, 8.507059e+37
    %v1669 = vand.u32 %v1657, 2147483648
    %v1670 = vor.u32 1.1754944e-38, %v1669
    %v1671 = vsel %vm1668, %v1670, %v1666
    %v1672 = vmul.f32 1.0, %v1671
    %v1673 = vmul.f32 %v1652, %v1584
    %v1674 = vadd.f32 %v1352, %v1673
    %v1675 = vtanh.pop %v1674
    %v1676 = vsub.f32 1.0, %v1672
    %v1677 = vmul.f32 %v1676, %v1675
    %v1678 = vmul.f32 %v1672, %v1504
    %v1679 = vadd.f32 %v1677, %v1678
    %v1680 = vsub.f32 %v1679, %v1504
    %1681 = vxpose.xlu0.b32.start [1/16] %v1288, 128
    %1682 = vxpose.xlu0.b32.cont [2/16] 0.0, 128
    %1683 = vxpose.xlu0.b32.cont [3/16] 0.0, 128
    %1684 = vxpose.xlu0.b32.cont [4/16] 0.0, 128
    %1685 = vxpose.xlu0.b32.cont [5/16] 0.0, 128
    %1686 = vxpose.xlu0.b32.cont [6/16] 0.0, 128
    %1687 = vxpose.xlu0.b32.cont [7/16] 0.0, 128
    %1688 = vxpose.xlu0.b32.cont [8/16] 0.0, 128
    %1689 = vxpose.xlu0.b32.cont [9/16] 0.0, 128
    %1690 = vxpose.xlu0.b32.cont [10/16] 0.0, 128
    %1691 = vxpose.xlu0.b32.cont [11/16] 0.0, 128
    %1692 = vxpose.xlu0.b32.cont [12/16] 0.0, 128
    %1693 = vxpose.xlu0.b32.cont [13/16] 0.0, 128
    %1694 = vxpose.xlu0.b32.cont [14/16] 0.0, 128
    %1695 = vxpose.xlu0.b32.cont [15/16] 0.0, 128
    %1696 = vxpose.xlu0.b32.end [16/16] 0.0, 128
    %v1697 = vpop.trf.xlu0
    %v1698 = vpop.trf.xlu0
    %v1699 = vpop.trf.xlu0
    %v1700 = vpop.trf.xlu0
    %v1701 = vpop.trf.xlu0
    %v1702 = vpop.trf.xlu0
    %v1703 = vpop.trf.xlu0
    %v1704 = vpop.trf.xlu0
    %v1705 = vpop.trf.xlu0
    %v1706 = vpop.trf.xlu0
    %v1707 = vpop.trf.xlu0
    %v1708 = vpop.trf.xlu0
    %v1709 = vpop.trf.xlu0
    %v1710 = vpop.trf.xlu0
    %v1711 = vpop.trf.xlu0
    %v1712 = vpop.trf.xlu0
    %v1714 = vsel %vm288, %v1697, 0
    %1716 = vmatpush.msra.mxu0 0.0
    %1717 = vmatpush.msra.mxu0 0.0
    %1718 = vmatpush.msra.mxu0 0.0
    %1719 = vmatpush.msra.mxu0 0.0
    %1720 = vmatpush.msra.mxu0 0.0
    %1721 = vmatpush.msra.mxu0 0.0
    %1722 = vmatpush.msra.mxu0 0.0
    %1723 = vmatpush.msra.mxu0 0.0
    %1724 = vmatpush.msra.mxu0 0.0
    %1725 = vmatpush.msra.mxu0 0.0
    %1726 = vmatpush.msra.mxu0 0.0
    %1727 = vmatpush.msra.mxu0 0.0
    %1728 = vmatpush.msra.mxu0 0.0
    %1729 = vmatpush.msra.mxu0 0.0
    %1730 = vmatpush.msra.mxu0 0.0
    %1731 = vmatpush.msra.mxu0 %v1680
    %1732 = vmatmul.f32.gmra.mxu0 %v1714
    %v1733 = vpop.f32.mrf.mxu0
    %v1734 = vadd.f32 0.0, %v1733
    %1735 = vdwg.mxu0
    %v1736 = vadd.f32 %v1361, %v1734
    %1737 = vst [vmem:[#allocation2] sm:$0xff] %v1736
    %v1738 = vld [vmem:[#allocation26] sm:$0xff]
    %v1739 = vadd.f32 %v1738, %v1610
    %1740 = vst [vmem:[#allocation26] sm:$0xff] %v1739
    %s1741 = scalar_lea.vmem [#allocation26], 8
    %v1742 = vld [vmem:[%s1741] sm:$0xff]
    %v1743 = vadd.f32 %v1742, %v1613
    %1744 = vst [vmem:[%s1741] sm:$0xff] %v1743
    %s1745 = scalar_lea.vmem [#allocation26], 16
    %v1746 = vld [vmem:[%s1745] sm:$0xff]
    %v1747 = vadd.f32 %v1746, %v1631
    %1748 = vst [vmem:[%s1745] sm:$0xff] %v1747
    %s1749 = scalar_lea.vmem [#allocation26], 24
    %v1750 = vld [vmem:[%s1749] sm:$0xff]
    %v1751 = vadd.f32 %v1750, %v1632
    %1752 = vst [vmem:[%s1749] sm:$0xff] %v1751
    // Predicated region
    $region143: #{tpu_custom_call.1} parent=1 // pred_check
      _
    $region144: #{tpu_custom_call.1} parent=1 // pred_check_branch
      %1754 = sbr.rel (0) target = $region146
    $region145: #{tpu_custom_call.1} parent=1 // pred_region
      %1756 = vsyncadd [#allocation7], 0
      %s1757 = sshll.u32 [#allocation26], 4
      %s1758 = int_to_ptr.vmem [resolvable:$true] %s1757
      %s1759 = sshll.u32 %s17, 4
      %s1760 = int_to_ptr.hbm [resolvable:$true] %s1759
      %1765 = dma.vmem_to_hbm [thread:$0]  %s1758, 512, %s1760, [#allocation7], 128, 128, 8
    $region146: #{tpu_custom_call.1} parent=1 // pred_fallthru
      _
    // Predicated region
    $region147: #{tpu_custom_call.1} parent=1 // pred_check
      _
    $region148: #{tpu_custom_call.1} parent=1 // pred_check_branch
      %1767 = sbr.rel (0) target = $region150
    $region149: #{tpu_custom_call.1} parent=1 // pred_region
      %1769 = dma.done [#allocation7], 512
    $region150: #{tpu_custom_call.1} parent=1 // pred_fallthru
      _
    %1770 = vsyncpa [#allocation6], 1
    %1771 = vsyncpa [#allocation9], 1
    %1772 = vsyncpa [#allocation12], 1
    %1773 = vsyncpa [#allocation15], 1
    %1774 = vsyncpa [#allocation18], 1
    %1775 = vsyncpa [#allocation21], 1
    %1776 = vsyncpa [#allocation24], 1
    %1777 = vsyncpa [#allocation7], 1

</llo_original>
